<compile_context>
chip_gen: v5e
topology: v5e:2x2
jax: 0.10.0
libtpu: 0.0.40
codegen_flags: <defaults>
</compile_context>

<pallas_src>
import jax
import jax.numpy as jnp
from jax.experimental import pallas as pl
from jax.experimental.pallas import tpu as pltpu


def _round_up(x: int, m: int) -> int:
    return (x + m - 1) // m * m


def _tpu_vmem_capacity() -> int:
    """Physical VMEM bytes per TensorCore (fallback: 128 MiB)."""
    try:
        return int(pltpu.get_tpu_info().vmem_capacity_bytes)
    except Exception:
        return 128 << 20


def default_tiles(hidden: int, n_tokens: int):
    """Generation-aware (tm, tk) defaults."""
    vmem_cap = _tpu_vmem_capacity()
    if vmem_cap >= (96 << 20):      # v5e / v6e: 128 MiB VMEM
        tm, tk = 512, 512
    else:                           # v7x: 64 MiB VMEM per TC
        tm, tk = 384, 256
    tm = max(16, min(tm, _round_up(n_tokens, 16)))
    tm = _round_up(tm, 16)          # bf16 sublane packing: (16, 128) per vreg
    tk = max(128, min(tk, _round_up(hidden, 128)))
    tk = _round_up(tk, 128)
    return tm, tk


def prepare_ffn_weights(wg, wu, wd, *, tk: int, compute_dtype=jnp.bfloat16):
    """One-time weight preparation (do NOT call per forward pass).

    wg, wu: [d_model, hidden]; wd: [hidden, d_model]
    (transposed relative to nn.Linear's [out, in] layout).

    Returns (wgu, wd_p):
      wgu:  [d_model, 2*H_pad] bf16, column-chunk interleaved [gate_k | up_k]
      wd_p: [H_pad, d_model]  bf16
    """
    assert tk % 128 == 0
    d_model, hidden = wg.shape
    H_pad = _round_up(hidden, tk)

    # Cast BEFORE padding/concatenating: no f32 temporaries in HBM.
    wg = wg.astype(compute_dtype)
    wu = wu.astype(compute_dtype)
    wd = wd.astype(compute_dtype)
    if H_pad != hidden:
        wg = jnp.pad(wg, ((0, 0), (0, H_pad - hidden)))
        wu = jnp.pad(wu, ((0, 0), (0, H_pad - hidden)))
        wd = jnp.pad(wd, ((0, H_pad - hidden), (0, 0)))

    n_h = H_pad // tk
    # Hidden chunk k occupies contiguous columns [k*2tk, (k+1)*2tk) = [gate_k | up_k].
    wgu = jnp.concatenate(
        [wg.reshape(d_model, n_h, tk), wu.reshape(d_model, n_h, tk)], axis=-1
    ).reshape(d_model, n_h * 2 * tk)
    return wgu, wd


def _ffn_kernel(x_ref, wgu_ref, wd_ref, o_ref, acc_ref):
    # x_ref:   (tm, d_model)    bf16 token tile (resident across j, k)
    # wgu_ref: (d_model, 2*tk)  bf16 fused [gate_k | up_k] weight chunk
    # wd_ref:  (tk, tn)         bf16 down-proj weight chunk
    # o_ref:   (tm, tn)         bf16 output tile (same block for every k)
    # acc_ref: (tm, tn) f32     VMEM accumulator
    k = pl.program_id(2)

    @pl.when(k == 0)
    def _init():
        acc_ref[...] = jnp.zeros_like(acc_ref)

    x = x_ref[...]
    # One fused MXU pass for gate+up (identical LHS), f32 accumulation.
    gu = jnp.dot(x, wgu_ref[...], preferred_element_type=jnp.float32)
    tk2 = wgu_ref.shape[-1] // 2
    g = gu[:, :tk2]
    u = gu[:, tk2:]
    h = (g * jax.nn.sigmoid(g)) * u                      # SiLU(gate) * up, f32

    # Partial down-projection of this hidden slice; accumulate in f32.
    acc_ref[...] += jnp.dot(h.astype(wd_ref.dtype), wd_ref[...],
                            preferred_element_type=jnp.float32)

    @pl.when(k == pl.num_programs(2) - 1)
    def _store():
        o_ref[...] = acc_ref[...].astype(o_ref.dtype)


def feedforward_pallas(x, wgu, wd, *, tm: int, tk: int, tn=None,
                       compute_dtype=jnp.bfloat16):
    """SwiGLU FFN forward with pre-fused weights from `prepare_ffn_weights`.

    x: [..., d_model].  Returns [..., d_model] in `compute_dtype` (bf16);
    cast back outside only if the caller truly needs f32.
    """
    orig_shape = x.shape
    d_model = orig_shape[-1]
    H_pad = wd.shape[0]
    assert wgu.shape == (d_model, 2 * H_pad)
    assert H_pad % tk == 0
    n_h = H_pad // tk

    x2 = x.reshape(-1, d_model)
    M = x2.shape[0]

    # --- token tile (multiple of 16 for bf16 sublane packing) ---------------
    tm = max(16, min(tm, _round_up(M, 16)))
    tm = _round_up(tm, 16)
    M_pad = _round_up(M, tm)
    if M_pad != M:
        x2 = jnp.pad(x2, ((0, M_pad - M), (0, 0)))   # zero rows: exact no-op
    x2 = x2.astype(compute_dtype)

    # --- output-column split (second parallel axis) -------------------------
    # Auto-enable only for decode-sized M on small-VMEM (v7x) parts so both
    # TensorCores get work; otherwise keep one block over d_model.
    if tn is None:
        if (M_pad // tm == 1 and d_model % 256 == 0
                and _tpu_vmem_capacity() < (96 << 20)):
            tn = d_model // 2
        else:
            tn = d_model
    assert d_model % tn == 0 and (tn == d_model or tn % 128 == 0)
    n_n = d_model // tn

    # --- VMEM budget: double-buffered tiles + f32 accumulator ---------------
    ci = jnp.dtype(compute_dtype).itemsize
    vmem_cap = _tpu_vmem_capacity()
    est = (2 * tm * d_model * ci          # x tiles
           + 2 * d_model * 2 * tk * ci    # fused gate/up chunks
           + 2 * tk * tn * ci             # down-proj chunks
           + 2 * tm * tn * ci             # output tiles (bf16)
           + tm * tn * 4)                 # accumulator (f32)
    vmem_limit = int(min(max(est * 5 // 4 + (2 << 20), 32 << 20),
                         vmem_cap * 85 // 100))

    grid = (M_pad // tm, n_n, n_h)        # tokens, out-cols parallel; hidden last

    out = pl.pallas_call(
        _ffn_kernel,
        out_shape=jax.ShapeDtypeStruct((M_pad, d_model), compute_dtype),
        grid_spec=pltpu.PrefetchScalarGridSpec(
            num_scalar_prefetch=0,
            grid=grid,
            in_specs=[
                pl.BlockSpec((tm, d_model), lambda i, j, k: (i, 0)),
                pl.BlockSpec((d_model, 2 * tk), lambda i, j, k: (0, k)),
                pl.BlockSpec((tk, tn), lambda i, j, k: (k, j)),
            ],
            out_specs=pl.BlockSpec((tm, tn), lambda i, j, k: (i, j)),
            scratch_shapes=[pltpu.VMEM((tm, tn), jnp.float32)],
        ),
        compiler_params=pltpu.CompilerParams(
            dimension_semantics=("parallel", "parallel", "arbitrary"),
            vmem_limit_bytes=vmem_limit,
        ),
    )(x2, wgu, wd)

    if M_pad != M:
        out = out[:M]
    return out.reshape(orig_shape[:-1] + (d_model,))


def feedforward_ref(x, wg, wu, wd, compute_dtype=jnp.bfloat16):
    """Pure-JAX reference at the kernel's precision (bf16 MXU, f32 acc)."""
    xd = x.astype(compute_dtype)
    g = jnp.dot(xd, wg.astype(compute_dtype), preferred_element_type=jnp.float32)
    u = jnp.dot(xd, wu.astype(compute_dtype), preferred_element_type=jnp.float32)
    h = (g * jax.nn.sigmoid(g)) * u
    y = jnp.dot(h.astype(compute_dtype), wd.astype(compute_dtype),
                preferred_element_type=jnp.float32)
    return y


if __name__ == "__main__":
    # Small, lane-aligned shapes consistent with the module: tokens = batch*seq.
    batch, seq, d_model, hidden = 2, 8, 256, 512

    key = jax.random.PRNGKey(0)
    kx, kg, ku, kd = jax.random.split(key, 4)

    x = jax.random.normal(kx, (batch, seq, d_model), dtype=jnp.float32)

    # Deterministic param init (nn.Linear-style uniform, stored transposed).
    scale_in = 1.0 / (d_model ** 0.5)
    scale_hid = 1.0 / (hidden ** 0.5)
    wg = jax.random.uniform(kg, (d_model, hidden), jnp.float32, -scale_in, scale_in)
    wu = jax.random.uniform(ku, (d_model, hidden), jnp.float32, -scale_in, scale_in)
    wd = jax.random.uniform(kd, (hidden, d_model), jnp.float32, -scale_hid, scale_hid)

    # Generation-aware tiles; one-time weight fusion (amortized across calls).
    tm, tk = default_tiles(hidden, n_tokens=batch * seq)
    wgu_p, wd_p = prepare_ffn_weights(wg, wu, wd, tk=tk)
    wgu_p = jax.block_until_ready(wgu_p)

    # Force a 2-way output-column split (tn=128) to exercise the dual-TC path.
    y = feedforward_pallas(x, wgu_p, wd_p, tm=tm, tk=tk, tn=128)
    y = jax.block_until_ready(y)

    # Reference at matching precision; kernel output is bf16.
    y_ref = feedforward_ref(x, wg, wu, wd)
    assert y.shape == x.shape, (y.shape, x.shape)
    y32 = y.astype(jnp.float32)
    r32 = y_ref.astype(jnp.float32)
    max_err = float(jnp.max(jnp.abs(y32 - r32)))
    assert jnp.allclose(y32, r32, atol=5e-2, rtol=5e-2), (
        f"mismatch vs reference (max abs err {max_err})")

    print("KERNEL_OK")
</pallas_src>

<mosaic_0001>
module attributes {stable_mosaic.version = 11 : i64} {
  func.func @_ffn_kernel(%arg0: i32, %arg1: i32, %arg2: i32, %arg3: memref<16x256xbf16, #tpu.memory_space<vmem>>, %arg4: memref<256x1024xbf16, #tpu.memory_space<vmem>>, %arg5: memref<512x128xbf16, #tpu.memory_space<vmem>>, %arg6: memref<16x128xbf16, #tpu.memory_space<vmem>>, %arg7: memref<16x128xf32, #tpu.memory_space<vmem>>) attributes {dimension_semantics = [#tpu.dimension_semantics<parallel>, #tpu.dimension_semantics<parallel>, #tpu.dimension_semantics<arbitrary>], iteration_bounds = array<i64: 1, 2, 1>, scalar_prefetch = 0 : i64, scratch_operands = 1 : i64, tpu.core_type = #tpu.core_type<tc>, window_params = [{transform_indices = @transform_0, window_bounds = array<i64: 16, 256>}, {transform_indices = @transform_1, window_bounds = array<i64: 256, 1024>}, {transform_indices = @transform_2, window_bounds = array<i64: 512, 128>}, {transform_indices = @transform_3, window_bounds = array<i64: 16, 128>}]} {
    %c0_i32 = arith.constant 0 : i32
    %0 = arith.cmpi eq, %arg2, %c0_i32 : i32
    %1 = arith.extui %0 : i1 to i32
    %c0_i32_0 = arith.constant 0 : i32
    %2 = arith.cmpi ne, %1, %c0_i32_0 : i32
    scf.if %2 {
      %cst_14 = arith.constant 0.000000e+00 : f32
      %24 = vector.broadcast %cst_14 : f32 to vector<16x128xf32>
      %c0_15 = arith.constant 0 : index
      %c0_16 = arith.constant 0 : index
      %25 = vector.load %arg7[%c0_15, %c0_16] : memref<16x128xf32, #tpu.memory_space<vmem>>, vector<16x128xf32>
      tpu.vector_store %arg7[%c0_15, %c0_16], %24 {strides = array<i32>} : memref<16x128xf32, #tpu.memory_space<vmem>>, vector<16x128xf32>,
    } else {
    }
    %c0 = arith.constant 0 : index
    %c0_1 = arith.constant 0 : index
    %3 = vector.load %arg3[%c0, %c0_1] : memref<16x256xbf16, #tpu.memory_space<vmem>>, vector<16x256xbf16>
    %c0_2 = arith.constant 0 : index
    %c0_3 = arith.constant 0 : index
    %4 = vector.load %arg4[%c0_2, %c0_3] : memref<256x1024xbf16, #tpu.memory_space<vmem>>, vector<256x1024xbf16>
    %cst = arith.constant dense<0.000000e+00> : vector<16x1024xf32>
    %5 = tpu.matmul %3, %4, %cst {dimension_numbers = #tpu.dot_dimension_numbers<[1], [0], [0], [1], [0, 0, 1, 1], [], []>} : vector<16x256xbf16>, vector<256x1024xbf16>, vector<16x1024xf32> -> vector<16x1024xf32>
    %6 = vector.extract_strided_slice %5 {offsets = [0, 0], sizes = [16, 512], strides = [1, 1]} : vector<16x1024xf32> to vector<16x512xf32>
    %7 = vector.extract_strided_slice %5 {offsets = [0, 512], sizes = [16, 512], strides = [1, 1]} : vector<16x1024xf32> to vector<16x512xf32>
    %8 = arith.negf %6 : vector<16x512xf32>
    %9 = math.exp %8 : vector<16x512xf32>
    %cst_4 = arith.constant 1.000000e+00 : f32
    %10 = vector.broadcast %cst_4 : f32 to vector<16x512xf32>
    %11 = arith.addf %10, %9 : vector<16x512xf32>
    %12 = arith.divf %10, %11 : vector<16x512xf32>
    %13 = arith.mulf %6, %12 : vector<16x512xf32>
    %14 = arith.mulf %13, %7 : vector<16x512xf32>
    %c0_5 = arith.constant 0 : index
    %c0_6 = arith.constant 0 : index
    %15 = vector.load %arg7[%c0_5, %c0_6] : memref<16x128xf32, #tpu.memory_space<vmem>>, vector<16x128xf32>
    %16 = arith.truncf %14 : vector<16x512xf32> to vector<16x512xbf16>
    %c0_7 = arith.constant 0 : index
    %c0_8 = arith.constant 0 : index
    %17 = vector.load %arg5[%c0_7, %c0_8] : memref<512x128xbf16, #tpu.memory_space<vmem>>, vector<512x128xbf16>
    %cst_9 = arith.constant dense<0.000000e+00> : vector<16x128xf32>
    %18 = tpu.matmul %16, %17, %cst_9 {dimension_numbers = #tpu.dot_dimension_numbers<[1], [0], [0], [1], [0, 0, 1, 1], [], []>} : vector<16x512xbf16>, vector<512x128xbf16>, vector<16x128xf32> -> vector<16x128xf32>
    %19 = arith.addf %15, %18 : vector<16x128xf32>
    %c0_10 = arith.constant 0 : index
    %c0_11 = arith.constant 0 : index
    %20 = vector.load %arg7[%c0_10, %c0_11] : memref<16x128xf32, #tpu.memory_space<vmem>>, vector<16x128xf32>
    tpu.vector_store %arg7[%c0_10, %c0_11], %19 {strides = array<i32>} : memref<16x128xf32, #tpu.memory_space<vmem>>, vector<16x128xf32>,
    %c0_i32_12 = arith.constant 0 : i32
    %21 = arith.cmpi eq, %arg2, %c0_i32_12 : i32
    %22 = arith.extui %21 : i1 to i32
    %c0_i32_13 = arith.constant 0 : i32
    %23 = arith.cmpi ne, %22, %c0_i32_13 : i32
    scf.if %23 {
      %c0_14 = arith.constant 0 : index
      %c0_15 = arith.constant 0 : index
      %24 = vector.load %arg7[%c0_14, %c0_15] : memref<16x128xf32, #tpu.memory_space<vmem>>, vector<16x128xf32>
      %25 = arith.truncf %24 : vector<16x128xf32> to vector<16x128xbf16>
      %c0_16 = arith.constant 0 : index
      %c0_17 = arith.constant 0 : index
      %26 = vector.load %arg6[%c0_16, %c0_17] : memref<16x128xbf16, #tpu.memory_space<vmem>>, vector<16x128xbf16>
      tpu.vector_store %arg6[%c0_16, %c0_17], %25 {strides = array<i32>} : memref<16x128xbf16, #tpu.memory_space<vmem>>, vector<16x128xbf16>,
    } else {
    }
    return
  }
  func.func @transform_0(%arg0: i32, %arg1: i32, %arg2: i32) -> (i32, i32) {
    %c0_i32 = arith.constant 0 : i32
    %c0_i32_0 = arith.constant 0 : i32
    return %arg0, %c0_i32 : i32, i32
  }
  func.func @transform_1(%arg0: i32, %arg1: i32, %arg2: i32) -> (i32, i32) {
    %c0_i32 = arith.constant 0 : i32
    %c0_i32_0 = arith.constant 0 : i32
    return %c0_i32, %arg2 : i32, i32
  }
  func.func @transform_2(%arg0: i32, %arg1: i32, %arg2: i32) -> (i32, i32) {
    %c0_i32 = arith.constant 0 : i32
    return %arg2, %arg1 : i32, i32
  }
  func.func @transform_3(%arg0: i32, %arg1: i32, %arg2: i32) -> (i32, i32) {
    %c0_i32 = arith.constant 0 : i32
    return %arg0, %arg1 : i32, i32
  }
}

</mosaic_0001>

<llo_original>
// kernel: tpu_custom_call.1
$region0: #{tpu_custom_call.1}
  #allocation0 [shape = 'u32[]', space=smem, size = 0x4, offset = 0x4, fixed_abs, tag = 'smem constant byte address 0x4 - core index']
  #allocation1 [shape = 'u32[72,128]{1,0:T(1,128)}', space=vmem, size = 0x9000, scoped, tag = 'internal scratch']
  #allocation2 [shape = 'f32[16,128]{1,0:T(8,128)}', space=vmem, size = 0x2000, scoped, tag = 'scratch operand']
  %s0 = inlined_call_operand.hbm [shape: bf16[16,256], index: 0, kind: input, shape index: {}]
  %s1 = inlined_call_operand.hbm [shape: bf16[256,1024], index: 1, kind: input, shape index: {}]
  %s2 = inlined_call_operand.hbm [shape: bf16[512,256], index: 2, kind: input, shape index: {}]
  %s3 = inlined_call_operand.hbm [shape: bf16[16,256], index: 3, kind: output, shape index: {}]
  %s4 = sld [smem:[#allocation0]]
  $region65: #{tpu_custom_call.1} parent=0
    _
  %s6 = ssub.s32 1, %s4
  %s7 = scalar_select 0, %s6, %s4
  $region1: #{tpu_custom_call.1} parent=0
    #allocation3 [shape = 'u8[8192]{0}', space=vmem, size = 0x2000, scoped, tag = 'input window, operand 0, single buffered']
    #allocation4 [shape = 's32[2]{0}', space=sflag, size = 0x8, scoped, tag = 'scoped memory for tpu_custom_call.1']
    #allocation5 [shape = 's32[2]{0}', space=sflag, size = 0x8, scoped, tag = 'scoped memory for tpu_custom_call.1']
    #allocation6 [shape = 'u8[524288]{0}', space=vmem, size = 0x80000, scoped, tag = 'input window, operand 1, single buffered']
    #allocation7 [shape = 's32[1]{0}', space=sflag, size = 0x4, scoped, tag = 'scoped memory for tpu_custom_call.1']
    #allocation8 [shape = 'u8[262144]{0}', space=vmem, size = 0x40000, scoped, tag = 'input window, operand 2']
    #allocation9 [shape = 'u8[8192]{0}', space=vmem, size = 0x2000, scoped, tag = 'output window, operand 0']
    %8 = vsyncpa [#allocation4], 0
    %9 = vsyncpa [#allocation7], 0
    %10 = vsyncpa [#allocation5], 0
    %s11 = scalar_lea.sflag [#allocation5], 1
    %12 = vsyncpa %s11, 0
    loop: start=0, step=1, limit=4
    $region2: #{tpu_custom_call.1} parent=1 // loop_pre_header
      _
    $region3: #{tpu_custom_call.1} parent=1 // loop_header
      %s14 = sphi 0, %s18
      %p15 = scmp.ge.s32.totalorder %s14, 4
      %s21 = sphi 0, %s40
      %s22 = sphi 0, %s36
      %s23 = sphi 0, %s32
      %s24 = sphi 0, %s21
      %s25 = sphi 0, %s22
      %s26 = sphi 0, %s23
      %s27 = sphi 0, %s24
      %s28 = sphi 0, %s25
      %s29 = sphi 0, %s26
      %s43 = sphi 0, %s45
      %s46 = sphi 0, %s43
      %s47 = sphi 0, %s46
      %s63 = sphi 0, %s47
      %s69 = sphi 0, %s71
      %s72 = sphi 0, %s69
      %s73 = sphi 0, %s72
      %s89 = sphi 0, %s73
      %s97 = sphi 0, %s99
      %s100 = sphi 0, %s97
      %s101 = sphi 0, %s100
      %s117 = sphi 0, %s101
      %s125 = sphi 0, %s127
      %s128 = sphi 0, %s125
      %s129 = sphi 0, %s128
      %s145 = sphi 0, %s129
    $region4: #{tpu_custom_call.1} parent=1 // loop_header_branch
      %17 = sbr.rel (%p15) target = $region8
    $region5: #{tpu_custom_call.1} parent=1 // loop_body
      %s19 = ssub.s32 %s14, 1
      %s20 = ssub.s32 %s14, 2
      %s30 = sadd.s32 1, %s23
      %p31 = scmp.ge.s32.totalorder %s30, 1
      %s32 = scalar_select %p31, 0, %s30
      %s33 = sadd.s32 1, %s22
      %s34 = scalar_select %p31, %s33, %s22
      %p35 = scmp.ge.s32.totalorder %s34, 2
      %s36 = scalar_select %p35, 0, %s34
      %s37 = sadd.s32 1, %s21
      %s38 = scalar_select %p35, %s37, %s21
      %p39 = scmp.ge.s32.totalorder %s38, 1
      %s40 = scalar_select %p39, 0, %s38
      %s41 = ssub.s32 %s21, %s40
      %p42 = scmp.eq.s32.totalorder %s41, 0
      %s44 = sadd.s32 %s43, 1
      %s45 = scalar_select %p42, %s43, %s44
      %p48 = pneg %p42
      %p49 = scmp.eq.s32.totalorder %s14, 1
      %p50 = por %p48, %p49
      %p51 = scmp.ne.s32.totalorder %s43, %s46
      %p52 = scmp.eq.s32.totalorder %s14, 0
      %p53 = por %p51, %p52
      %p54 = scmp.ne.s32.totalorder %s43, %s46
      %p55 = scmp.eq.s32.totalorder %s19, 1
      %p56 = por %p54, %p55
      %p57 = scmp.ne.s32.totalorder %s46, %s47
      %p58 = scmp.eq.s32.totalorder %s19, 0
      %p59 = por %p57, %p58
      %p60 = scmp.ne.s32.totalorder %s46, %s47
      %p61 = scmp.eq.s32.totalorder %s20, 1
      %p62 = por %p60, %p61
      %p64 = scmp.ne.s32.totalorder %s47, %s63
      %p65 = scmp.eq.s32.totalorder %s20, 0
      %p66 = por %p64, %p65
      %s67 = ssub.s32 %s23, %s32
      %p68 = scmp.eq.s32.totalorder %s67, 0
      %s70 = sadd.s32 %s69, 1
      %s71 = scalar_select %p68, %s69, %s70
      %p74 = pneg %p68
      %p75 = scmp.eq.s32.totalorder %s14, 1
      %p76 = por %p74, %p75
      %p77 = scmp.ne.s32.totalorder %s69, %s72
      %p78 = scmp.eq.s32.totalorder %s14, 0
      %p79 = por %p77, %p78
      %p80 = scmp.ne.s32.totalorder %s69, %s72
      %p81 = scmp.eq.s32.totalorder %s19, 1
      %p82 = por %p80, %p81
      %p83 = scmp.ne.s32.totalorder %s72, %s73
      %p84 = scmp.eq.s32.totalorder %s19, 0
      %p85 = por %p83, %p84
      %p86 = scmp.ne.s32.totalorder %s72, %s73
      %p87 = scmp.eq.s32.totalorder %s20, 1
      %p88 = por %p86, %p87
      %p90 = scmp.ne.s32.totalorder %s73, %s89
      %p91 = scmp.eq.s32.totalorder %s20, 0
      %p92 = por %p90, %p91
      %s93 = ssub.s32 %s23, %s32
      %s94 = ssub.s32 %s22, %s36
      %s95 = sor.u32 %s93, %s94
      %p96 = scmp.eq.s32.totalorder %s95, 0
      %s98 = sadd.s32 %s97, 1
      %s99 = scalar_select %p96, %s97, %s98
      %p102 = pneg %p96
      %p103 = scmp.eq.s32.totalorder %s14, 1
      %p104 = por %p102, %p103
      %p105 = scmp.ne.s32.totalorder %s97, %s100
      %p106 = scmp.eq.s32.totalorder %s14, 0
      %p107 = por %p105, %p106
      %p108 = scmp.ne.s32.totalorder %s97, %s100
      %p109 = scmp.eq.s32.totalorder %s19, 1
      %p110 = por %p108, %p109
      %p111 = scmp.ne.s32.totalorder %s100, %s101
      %p112 = scmp.eq.s32.totalorder %s19, 0
      %p113 = por %p111, %p112
      %p114 = scmp.ne.s32.totalorder %s100, %s101
      %p115 = scmp.eq.s32.totalorder %s20, 1
      %p116 = por %p114, %p115
      %p118 = scmp.ne.s32.totalorder %s101, %s117
      %p119 = scmp.eq.s32.totalorder %s20, 0
      %p120 = por %p118, %p119
      %s121 = ssub.s32 %s21, %s40
      %s122 = ssub.s32 %s22, %s36
      %s123 = sor.u32 %s121, %s122
      %p124 = scmp.eq.s32.totalorder %s123, 0
      %s126 = sadd.s32 %s125, 1
      %s127 = scalar_select %p124, %s125, %s126
      %p130 = pneg %p124
      %p131 = scmp.eq.s32.totalorder %s14, 1
      %p132 = por %p130, %p131
      %p133 = scmp.ne.s32.totalorder %s125, %s128
      %p134 = scmp.eq.s32.totalorder %s14, 0
      %p135 = por %p133, %p134
      %p136 = scmp.ne.s32.totalorder %s125, %s128
      %p137 = scmp.eq.s32.totalorder %s19, 1
      %p138 = por %p136, %p137
      %p139 = scmp.ne.s32.totalorder %s128, %s129
      %p140 = scmp.eq.s32.totalorder %s19, 0
      %p141 = por %p139, %p140
      %p142 = scmp.ne.s32.totalorder %s128, %s129
      %p143 = scmp.eq.s32.totalorder %s20, 1
      %p144 = por %p142, %p143
      %p146 = scmp.ne.s32.totalorder %s129, %s145
      %p147 = scmp.eq.s32.totalorder %s20, 0
      %p148 = por %p146, %p147
      %p149 = scmp.le.s32.totalorder 1, %s14
      %p150 = scmp.lt.s32.totalorder %s14, 3
      %p151 = pnand %p149, %p150
      %p152 = pneg %p151
      // Predicated region
      $region9: #{tpu_custom_call.1} parent=5 // pred_check
        _
      $region10: #{tpu_custom_call.1} parent=5 // pred_check_branch
        %154 = sbr.rel (%p151) target = $region12
      $region11: #{tpu_custom_call.1} parent=5 // pred_region
        %s155 = ssub.s32 %s14, 1
        // Predicated region
        $region13: #{tpu_custom_call.1} parent=11 // pred_check
          %p156 = pneg %p59
        $region14: #{tpu_custom_call.1} parent=11 // pred_check_branch
          %158 = sbr.rel (%p156) target = $region16
        $region15: #{tpu_custom_call.1} parent=11 // pred_region
          %s159 = smul.u32 2, %s24
          %161 = vsyncadd [#allocation4], 0
          %s162 = smul.addr %s159, 2
          %s163 = smul.addr %s162, 4
          %s164 = scalar_lea.hbm %s0, %s163
          %s165 = sshll.u32 %s164, 4
          %s166 = int_to_ptr.hbm [resolvable:$true] %s165
          %s167 = sshll.u32 [#allocation3], 4
          %s168 = int_to_ptr.vmem [resolvable:$true] %s167
          %173 = dma.hbm_to_vmem [thread:$0]  %s166, 256, %s168, [#allocation4], 128, 128, 8
        $region16: #{tpu_custom_call.1} parent=11 // pred_fallthru
          _
        // Predicated region
        $region17: #{tpu_custom_call.1} parent=11 // pred_check
          %p174 = pneg %p85
        $region18: #{tpu_custom_call.1} parent=11 // pred_check_branch
          %176 = sbr.rel (%p174) target = $region20
        $region19: #{tpu_custom_call.1} parent=11 // pred_region
          %s177 = smul.u32 8, %s26
          %179 = vsyncadd [#allocation7], 0
          %s180 = smul.addr %s177, 4
          %s181 = scalar_lea.hbm %s1, %s180
          %s182 = sshll.u32 %s181, 4
          %s183 = int_to_ptr.hbm [resolvable:$true] %s182
          %s184 = sshll.u32 [#allocation6], 4
          %s185 = int_to_ptr.vmem [resolvable:$true] %s184
          %190 = dma.hbm_to_vmem [thread:$0]  %s183, 16384, %s185, [#allocation7], 512, 512, 32
        $region20: #{tpu_custom_call.1} parent=11 // pred_fallthru
          _
      $region12: #{tpu_custom_call.1} parent=5 // pred_fallthru
        _
      %p191 = scmp.lt.s32.totalorder %s14, 2
      // Predicated region
      $region21: #{tpu_custom_call.1} parent=5 // pred_check
        %p192 = pneg %p191
      $region22: #{tpu_custom_call.1} parent=5 // pred_check_branch
        %194 = sbr.rel (%p192) target = $region24
      $region23: #{tpu_custom_call.1} parent=5 // pred_region
        // Predicated region
        $region25: #{tpu_custom_call.1} parent=23 // pred_check
          %p195 = pneg %p107
        $region26: #{tpu_custom_call.1} parent=23 // pred_check_branch
          %197 = sbr.rel (%p195) target = $region28
        $region27: #{tpu_custom_call.1} parent=23 // pred_region
          %s198 = sand.u32 %s14, 1
          %s199 = scalar_lea.sflag [#allocation4], %s198
          %s200 = sand.u32 %s97, 1
          %s201 = smul.addr %s200, 256
          %s202 = scalar_lea.vmem [#allocation8], %s201
          %s203 = smul.u32 64, %s23
          %205 = vsyncadd %s199, 0
          %s206 = smul.addr %s203, 2
          %s207 = sadd.s32 %s22, %s206
          %s208 = smul.addr %s207, 4
          %s209 = scalar_lea.hbm %s2, %s208
          %s210 = sshll.u32 %s209, 4
          %s211 = int_to_ptr.hbm [resolvable:$true] %s210
          %s212 = sshll.u32 %s202, 4
          %s213 = int_to_ptr.vmem [resolvable:$true] %s212
          %218 = dma.hbm_to_vmem [thread:$0]  %s211, 4096, %s213, %s199, 128, 64, 4
        $region28: #{tpu_custom_call.1} parent=23 // pred_fallthru
          _
      $region24: #{tpu_custom_call.1} parent=5 // pred_fallthru
        _
      %p219 = scmp.le.s32.totalorder 1, %s14
      %p220 = scmp.lt.s32.totalorder %s14, 3
      %p221 = pnand %p219, %p220
      %p222 = pneg %p221
      // Predicated region
      $region29: #{tpu_custom_call.1} parent=5 // pred_check
        _
      $region30: #{tpu_custom_call.1} parent=5 // pred_check_branch
        %224 = sbr.rel (%p221) target = $region32
      $region31: #{tpu_custom_call.1} parent=5 // pred_region
        %s225 = ssub.s32 %s14, 1
        // Predicated region
        $region33: #{tpu_custom_call.1} parent=31 // pred_check
          %p226 = pneg %p59
        $region34: #{tpu_custom_call.1} parent=31 // pred_check_branch
          %228 = sbr.rel (%p226) target = $region36
        $region35: #{tpu_custom_call.1} parent=31 // pred_region
          %230 = dma.done [#allocation4], 256
        $region36: #{tpu_custom_call.1} parent=31 // pred_fallthru
          _
        // Predicated region
        $region37: #{tpu_custom_call.1} parent=31 // pred_check
          %p231 = pneg %p85
        $region38: #{tpu_custom_call.1} parent=31 // pred_check_branch
          %233 = sbr.rel (%p231) target = $region40
        $region39: #{tpu_custom_call.1} parent=31 // pred_region
          %235 = dma.done [#allocation7], 16384
        $region40: #{tpu_custom_call.1} parent=31 // pred_fallthru
          _
        %s236 = sand.u32 %s19, 1
        %s237 = scalar_lea.sflag [#allocation4], %s236
        %s238 = sand.u32 %s100, 1
        %s239 = smul.addr %s238, 256
        %s240 = scalar_lea.vmem [#allocation8], %s239
        // Predicated region
        $region41: #{tpu_custom_call.1} parent=31 // pred_check
          %p241 = pneg %p113
        $region42: #{tpu_custom_call.1} parent=31 // pred_check_branch
          %243 = sbr.rel (%p241) target = $region44
        $region43: #{tpu_custom_call.1} parent=31 // pred_region
          %245 = dma.done %s237, 4096
        $region44: #{tpu_custom_call.1} parent=31 // pred_fallthru
          _
        %p246 = pneg %p59
        %p247 = pneg %p56
        %p248 = pneg %p85
        %p249 = pneg %p82
        %s250 = sand.u32 %s19, 1
        %s251 = scalar_lea.sflag [#allocation4], %s250
        %s252 = sand.u32 %s100, 1
        %s253 = smul.addr %s252, 256
        %s254 = scalar_lea.vmem [#allocation8], %s253
        %p255 = pneg %p113
        %p256 = pneg %p110
        %p257 = pneg %p141
        %p258 = pneg %p138
        %s259 = sand.u32 %s128, 1
        %s260 = scalar_lea.sflag [#allocation5], %s259
        %s261 = sand.u32 %s128, 1
        %s262 = smul.addr %s261, 8
        %s263 = scalar_lea.vmem [#allocation9], %s262
        %s264 = smul.u32 2, %s24
        %s265 = smul.u32 8, %s26
        %s266 = smul.u32 64, %s26
        %s267 = smul.u32 2, %s24
        %p268 = scmp.eq.s32.totalorder %s26, 0
        // Predicated region
        $region45: #{tpu_custom_call.1} parent=31 // pred_check
          %p269 = pneg %p268
        $region46: #{tpu_custom_call.1} parent=31 // pred_check_branch
          %271 = sbr.rel (%p269) target = $region48
        $region47: #{tpu_custom_call.1} parent=31 // pred_region
          %272 = vst [vmem:[#allocation2] sm:$0xff] 0.0
          %273 = vst [vmem:[#allocation2 + $0x8] sm:$0xff] 0.0
        $region48: #{tpu_custom_call.1} parent=31 // pred_fallthru
          _
        %v274 = vld [vmem:[#allocation3] sm:$0xff]
        %v275 = vld [vmem:[#allocation3 + $0x8] sm:$0xff]
        %v276 = vld [vmem:[#allocation6] sm:$0xff]
        %v277 = vld [vmem:[#allocation6 + $0x8] sm:$0xff]
        %v278 = vld [vmem:[#allocation6 + $0x10] sm:$0xff]
        %v279 = vld [vmem:[#allocation6 + $0x18] sm:$0xff]
        %v280 = vld [vmem:[#allocation6 + $0x20] sm:$0xff]
        %v281 = vld [vmem:[#allocation6 + $0x28] sm:$0xff]
        %v282 = vld [vmem:[#allocation6 + $0x30] sm:$0xff]
        %v283 = vld [vmem:[#allocation6 + $0x38] sm:$0xff]
        %v284 = vld [vmem:[#allocation6 + $0x40] sm:$0xff]
        %v285 = vld [vmem:[#allocation6 + $0x48] sm:$0xff]
        %v286 = vld [vmem:[#allocation6 + $0x50] sm:$0xff]
        %v287 = vld [vmem:[#allocation6 + $0x58] sm:$0xff]
        %v288 = vld [vmem:[#allocation6 + $0x60] sm:$0xff]
        %v289 = vld [vmem:[#allocation6 + $0x68] sm:$0xff]
        %v290 = vld [vmem:[#allocation6 + $0x70] sm:$0xff]
        %v291 = vld [vmem:[#allocation6 + $0x78] sm:$0xff]
        %v292 = vld [vmem:[#allocation6 + $0x80] sm:$0xff]
        %v293 = vld [vmem:[#allocation6 + $0x88] sm:$0xff]
        %v294 = vld [vmem:[#allocation6 + $0x90] sm:$0xff]
        %v295 = vld [vmem:[#allocation6 + $0x98] sm:$0xff]
        %v296 = vld [vmem:[#allocation6 + $0xa0] sm:$0xff]
        %v297 = vld [vmem:[#allocation6 + $0xa8] sm:$0xff]
        %v298 = vld [vmem:[#allocation6 + $0xb0] sm:$0xff]
        %v299 = vld [vmem:[#allocation6 + $0xb8] sm:$0xff]
        %v300 = vld [vmem:[#allocation6 + $0xc0] sm:$0xff]
        %v301 = vld [vmem:[#allocation6 + $0xc8] sm:$0xff]
        %v302 = vld [vmem:[#allocation6 + $0xd0] sm:$0xff]
        %v303 = vld [vmem:[#allocation6 + $0xd8] sm:$0xff]
        %v304 = vld [vmem:[#allocation6 + $0xe0] sm:$0xff]
        %v305 = vld [vmem:[#allocation6 + $0xe8] sm:$0xff]
        %v306 = vld [vmem:[#allocation6 + $0xf0] sm:$0xff]
        %v307 = vld [vmem:[#allocation6 + $0xf8] sm:$0xff]
        %v308 = vld [vmem:[#allocation6 + $0x100] sm:$0xff]
        %v309 = vld [vmem:[#allocation6 + $0x108] sm:$0xff]
        %v310 = vld [vmem:[#allocation6 + $0x110] sm:$0xff]
        %v311 = vld [vmem:[#allocation6 + $0x118] sm:$0xff]
        %v312 = vld [vmem:[#allocation6 + $0x120] sm:$0xff]
        %v313 = vld [vmem:[#allocation6 + $0x128] sm:$0xff]
        %v314 = vld [vmem:[#allocation6 + $0x130] sm:$0xff]
        %v315 = vld [vmem:[#allocation6 + $0x138] sm:$0xff]
        %v316 = vld [vmem:[#allocation6 + $0x140] sm:$0xff]
        %v317 = vld [vmem:[#allocation6 + $0x148] sm:$0xff]
        %v318 = vld [vmem:[#allocation6 + $0x150] sm:$0xff]
        %v319 = vld [vmem:[#allocation6 + $0x158] sm:$0xff]
        %v320 = vld [vmem:[#allocation6 + $0x160] sm:$0xff]
        %v321 = vld [vmem:[#allocation6 + $0x168] sm:$0xff]
        %v322 = vld [vmem:[#allocation6 + $0x170] sm:$0xff]
        %v323 = vld [vmem:[#allocation6 + $0x178] sm:$0xff]
        %v324 = vld [vmem:[#allocation6 + $0x180] sm:$0xff]
        %v325 = vld [vmem:[#allocation6 + $0x188] sm:$0xff]
        %v326 = vld [vmem:[#allocation6 + $0x190] sm:$0xff]
        %v327 = vld [vmem:[#allocation6 + $0x198] sm:$0xff]
        %v328 = vld [vmem:[#allocation6 + $0x1a0] sm:$0xff]
        %v329 = vld [vmem:[#allocation6 + $0x1a8] sm:$0xff]
        %v330 = vld [vmem:[#allocation6 + $0x1b0] sm:$0xff]
        %v331 = vld [vmem:[#allocation6 + $0x1b8] sm:$0xff]
        %v332 = vld [vmem:[#allocation6 + $0x1c0] sm:$0xff]
        %v333 = vld [vmem:[#allocation6 + $0x1c8] sm:$0xff]
        %v334 = vld [vmem:[#allocation6 + $0x1d0] sm:$0xff]
        %v335 = vld [vmem:[#allocation6 + $0x1d8] sm:$0xff]
        %v336 = vld [vmem:[#allocation6 + $0x1e0] sm:$0xff]
        %v337 = vld [vmem:[#allocation6 + $0x1e8] sm:$0xff]
        %v338 = vld [vmem:[#allocation6 + $0x1f0] sm:$0xff]
        %v339 = vld [vmem:[#allocation6 + $0x1f8] sm:$0xff]
        %v340 = vld [vmem:[#allocation6 + $0x200] sm:$0xff]
        %v341 = vld [vmem:[#allocation6 + $0x208] sm:$0xff]
        %v342 = vld [vmem:[#allocation6 + $0x210] sm:$0xff]
        %v343 = vld [vmem:[#allocation6 + $0x218] sm:$0xff]
        %v344 = vld [vmem:[#allocation6 + $0x220] sm:$0xff]
        %v345 = vld [vmem:[#allocation6 + $0x228] sm:$0xff]
        %v346 = vld [vmem:[#allocation6 + $0x230] sm:$0xff]
        %v347 = vld [vmem:[#allocation6 + $0x238] sm:$0xff]
        %v348 = vld [vmem:[#allocation6 + $0x240] sm:$0xff]
        %v349 = vld [vmem:[#allocation6 + $0x248] sm:$0xff]
        %v350 = vld [vmem:[#allocation6 + $0x250] sm:$0xff]
        %v351 = vld [vmem:[#allocation6 + $0x258] sm:$0xff]
        %v352 = vld [vmem:[#allocation6 + $0x260] sm:$0xff]
        %v353 = vld [vmem:[#allocation6 + $0x268] sm:$0xff]
        %v354 = vld [vmem:[#allocation6 + $0x270] sm:$0xff]
        %v355 = vld [vmem:[#allocation6 + $0x278] sm:$0xff]
        %v356 = vld [vmem:[#allocation6 + $0x280] sm:$0xff]
        %v357 = vld [vmem:[#allocation6 + $0x288] sm:$0xff]
        %v358 = vld [vmem:[#allocation6 + $0x290] sm:$0xff]
        %v359 = vld [vmem:[#allocation6 + $0x298] sm:$0xff]
        %v360 = vld [vmem:[#allocation6 + $0x2a0] sm:$0xff]
        %v361 = vld [vmem:[#allocation6 + $0x2a8] sm:$0xff]
        %v362 = vld [vmem:[#allocation6 + $0x2b0] sm:$0xff]
        %v363 = vld [vmem:[#allocation6 + $0x2b8] sm:$0xff]
        %v364 = vld [vmem:[#allocation6 + $0x2c0] sm:$0xff]
        %v365 = vld [vmem:[#allocation6 + $0x2c8] sm:$0xff]
        %v366 = vld [vmem:[#allocation6 + $0x2d0] sm:$0xff]
        %v367 = vld [vmem:[#allocation6 + $0x2d8] sm:$0xff]
        %v368 = vld [vmem:[#allocation6 + $0x2e0] sm:$0xff]
        %v369 = vld [vmem:[#allocation6 + $0x2e8] sm:$0xff]
        %v370 = vld [vmem:[#allocation6 + $0x2f0] sm:$0xff]
        %v371 = vld [vmem:[#allocation6 + $0x2f8] sm:$0xff]
        %v372 = vld [vmem:[#allocation6 + $0x300] sm:$0xff]
        %v373 = vld [vmem:[#allocation6 + $0x308] sm:$0xff]
        %v374 = vld [vmem:[#allocation6 + $0x310] sm:$0xff]
        %v375 = vld [vmem:[#allocation6 + $0x318] sm:$0xff]
        %v376 = vld [vmem:[#allocation6 + $0x320] sm:$0xff]
        %v377 = vld [vmem:[#allocation6 + $0x328] sm:$0xff]
        %v378 = vld [vmem:[#allocation6 + $0x330] sm:$0xff]
        %v379 = vld [vmem:[#allocation6 + $0x338] sm:$0xff]
        %v380 = vld [vmem:[#allocation6 + $0x340] sm:$0xff]
        %v381 = vld [vmem:[#allocation6 + $0x348] sm:$0xff]
        %v382 = vld [vmem:[#allocation6 + $0x350] sm:$0xff]
        %v383 = vld [vmem:[#allocation6 + $0x358] sm:$0xff]
        %v384 = vld [vmem:[#allocation6 + $0x360] sm:$0xff]
        %v385 = vld [vmem:[#allocation6 + $0x368] sm:$0xff]
        %v386 = vld [vmem:[#allocation6 + $0x370] sm:$0xff]
        %v387 = vld [vmem:[#allocation6 + $0x378] sm:$0xff]
        %v388 = vld [vmem:[#allocation6 + $0x380] sm:$0xff]
        %v389 = vld [vmem:[#allocation6 + $0x388] sm:$0xff]
        %v390 = vld [vmem:[#allocation6 + $0x390] sm:$0xff]
        %v391 = vld [vmem:[#allocation6 + $0x398] sm:$0xff]
        %v392 = vld [vmem:[#allocation6 + $0x3a0] sm:$0xff]
        %v393 = vld [vmem:[#allocation6 + $0x3a8] sm:$0xff]
        %v394 = vld [vmem:[#allocation6 + $0x3b0] sm:$0xff]
        %v395 = vld [vmem:[#allocation6 + $0x3b8] sm:$0xff]
        %v396 = vld [vmem:[#allocation6 + $0x3c0] sm:$0xff]
        %v397 = vld [vmem:[#allocation6 + $0x3c8] sm:$0xff]
        %v398 = vld [vmem:[#allocation6 + $0x3d0] sm:$0xff]
        %v399 = vld [vmem:[#allocation6 + $0x3d8] sm:$0xff]
        %v400 = vld [vmem:[#allocation6 + $0x3e0] sm:$0xff]
        %v401 = vld [vmem:[#allocation6 + $0x3e8] sm:$0xff]
        %v402 = vld [vmem:[#allocation6 + $0x3f0] sm:$0xff]
        %v403 = vld [vmem:[#allocation6 + $0x3f8] sm:$0xff]
        %v406 = vunpack.c.l.b16 %v274
        %v407 = vunpack.c.h.b16 %v274
        %v408 = vunpack.c.l.b16 %v275
        %v409 = vunpack.c.h.b16 %v275
        %v410 = vpack.c.b16 %v408, %v406
        %v411 = vpack.c.b16 %v409, %v407
        %v542 = vunpack.c.l.b16 %v276
        %v543 = vunpack.c.h.b16 %v276
        %v544 = vunpack.c.l.b16 %v277
        %v545 = vunpack.c.h.b16 %v277
        %v546 = vunpack.c.l.b16 %v278
        %v547 = vunpack.c.h.b16 %v278
        %v548 = vunpack.c.l.b16 %v279
        %v549 = vunpack.c.h.b16 %v279
        %v550 = vunpack.c.l.b16 %v280
        %v551 = vunpack.c.h.b16 %v280
        %v552 = vunpack.c.l.b16 %v281
        %v553 = vunpack.c.h.b16 %v281
        %v554 = vunpack.c.l.b16 %v282
        %v555 = vunpack.c.h.b16 %v282
        %v556 = vunpack.c.l.b16 %v283
        %v557 = vunpack.c.h.b16 %v283
        %v558 = vunpack.c.l.b16 %v284
        %v559 = vunpack.c.h.b16 %v284
        %v560 = vunpack.c.l.b16 %v285
        %v561 = vunpack.c.h.b16 %v285
        %v562 = vunpack.c.l.b16 %v286
        %v563 = vunpack.c.h.b16 %v286
        %v564 = vunpack.c.l.b16 %v287
        %v565 = vunpack.c.h.b16 %v287
        %v566 = vunpack.c.l.b16 %v288
        %v567 = vunpack.c.h.b16 %v288
        %v568 = vunpack.c.l.b16 %v289
        %v569 = vunpack.c.h.b16 %v289
        %v570 = vunpack.c.l.b16 %v290
        %v571 = vunpack.c.h.b16 %v290
        %v572 = vunpack.c.l.b16 %v291
        %v573 = vunpack.c.h.b16 %v291
        %v574 = vunpack.c.l.b16 %v292
        %v575 = vunpack.c.h.b16 %v292
        %v576 = vunpack.c.l.b16 %v293
        %v577 = vunpack.c.h.b16 %v293
        %v578 = vunpack.c.l.b16 %v294
        %v579 = vunpack.c.h.b16 %v294
        %v580 = vunpack.c.l.b16 %v295
        %v581 = vunpack.c.h.b16 %v295
        %v582 = vunpack.c.l.b16 %v296
        %v583 = vunpack.c.h.b16 %v296
        %v584 = vunpack.c.l.b16 %v297
        %v585 = vunpack.c.h.b16 %v297
        %v586 = vunpack.c.l.b16 %v298
        %v587 = vunpack.c.h.b16 %v298
        %v588 = vunpack.c.l.b16 %v299
        %v589 = vunpack.c.h.b16 %v299
        %v590 = vunpack.c.l.b16 %v300
        %v591 = vunpack.c.h.b16 %v300
        %v592 = vunpack.c.l.b16 %v301
        %v593 = vunpack.c.h.b16 %v301
        %v594 = vunpack.c.l.b16 %v302
        %v595 = vunpack.c.h.b16 %v302
        %v596 = vunpack.c.l.b16 %v303
        %v597 = vunpack.c.h.b16 %v303
        %v598 = vunpack.c.l.b16 %v304
        %v599 = vunpack.c.h.b16 %v304
        %v600 = vunpack.c.l.b16 %v305
        %v601 = vunpack.c.h.b16 %v305
        %v602 = vunpack.c.l.b16 %v306
        %v603 = vunpack.c.h.b16 %v306
        %v604 = vunpack.c.l.b16 %v307
        %v605 = vunpack.c.h.b16 %v307
        %v606 = vunpack.c.l.b16 %v308
        %v607 = vunpack.c.h.b16 %v308
        %v608 = vunpack.c.l.b16 %v309
        %v609 = vunpack.c.h.b16 %v309
        %v610 = vunpack.c.l.b16 %v310
        %v611 = vunpack.c.h.b16 %v310
        %v612 = vunpack.c.l.b16 %v311
        %v613 = vunpack.c.h.b16 %v311
        %v614 = vunpack.c.l.b16 %v312
        %v615 = vunpack.c.h.b16 %v312
        %v616 = vunpack.c.l.b16 %v313
        %v617 = vunpack.c.h.b16 %v313
        %v618 = vunpack.c.l.b16 %v314
        %v619 = vunpack.c.h.b16 %v314
        %v620 = vunpack.c.l.b16 %v315
        %v621 = vunpack.c.h.b16 %v315
        %v622 = vunpack.c.l.b16 %v316
        %v623 = vunpack.c.h.b16 %v316
        %v624 = vunpack.c.l.b16 %v317
        %v625 = vunpack.c.h.b16 %v317
        %v626 = vunpack.c.l.b16 %v318
        %v627 = vunpack.c.h.b16 %v318
        %v628 = vunpack.c.l.b16 %v319
        %v629 = vunpack.c.h.b16 %v319
        %v630 = vunpack.c.l.b16 %v320
        %v631 = vunpack.c.h.b16 %v320
        %v632 = vunpack.c.l.b16 %v321
        %v633 = vunpack.c.h.b16 %v321
        %v634 = vunpack.c.l.b16 %v322
        %v635 = vunpack.c.h.b16 %v322
        %v636 = vunpack.c.l.b16 %v323
        %v637 = vunpack.c.h.b16 %v323
        %v638 = vunpack.c.l.b16 %v324
        %v639 = vunpack.c.h.b16 %v324
        %v640 = vunpack.c.l.b16 %v325
        %v641 = vunpack.c.h.b16 %v325
        %v642 = vunpack.c.l.b16 %v326
        %v643 = vunpack.c.h.b16 %v326
        %v644 = vunpack.c.l.b16 %v327
        %v645 = vunpack.c.h.b16 %v327
        %v646 = vunpack.c.l.b16 %v328
        %v647 = vunpack.c.h.b16 %v328
        %v648 = vunpack.c.l.b16 %v329
        %v649 = vunpack.c.h.b16 %v329
        %v650 = vunpack.c.l.b16 %v330
        %v651 = vunpack.c.h.b16 %v330
        %v652 = vunpack.c.l.b16 %v331
        %v653 = vunpack.c.h.b16 %v331
        %v654 = vunpack.c.l.b16 %v332
        %v655 = vunpack.c.h.b16 %v332
        %v656 = vunpack.c.l.b16 %v333
        %v657 = vunpack.c.h.b16 %v333
        %v658 = vunpack.c.l.b16 %v334
        %v659 = vunpack.c.h.b16 %v334
        %v660 = vunpack.c.l.b16 %v335
        %v661 = vunpack.c.h.b16 %v335
        %v662 = vunpack.c.l.b16 %v336
        %v663 = vunpack.c.h.b16 %v336
        %v664 = vunpack.c.l.b16 %v337
        %v665 = vunpack.c.h.b16 %v337
        %v666 = vunpack.c.l.b16 %v338
        %v667 = vunpack.c.h.b16 %v338
        %v668 = vunpack.c.l.b16 %v339
        %v669 = vunpack.c.h.b16 %v339
        %v670 = vunpack.c.l.b16 %v340
        %v671 = vunpack.c.h.b16 %v340
        %v672 = vunpack.c.l.b16 %v341
        %v673 = vunpack.c.h.b16 %v341
        %v674 = vunpack.c.l.b16 %v342
        %v675 = vunpack.c.h.b16 %v342
        %v676 = vunpack.c.l.b16 %v343
        %v677 = vunpack.c.h.b16 %v343
        %v678 = vunpack.c.l.b16 %v344
        %v679 = vunpack.c.h.b16 %v344
        %v680 = vunpack.c.l.b16 %v345
        %v681 = vunpack.c.h.b16 %v345
        %v682 = vunpack.c.l.b16 %v346
        %v683 = vunpack.c.h.b16 %v346
        %v684 = vunpack.c.l.b16 %v347
        %v685 = vunpack.c.h.b16 %v347
        %v686 = vunpack.c.l.b16 %v348
        %v687 = vunpack.c.h.b16 %v348
        %v688 = vunpack.c.l.b16 %v349
        %v689 = vunpack.c.h.b16 %v349
        %v690 = vunpack.c.l.b16 %v350
        %v691 = vunpack.c.h.b16 %v350
        %v692 = vunpack.c.l.b16 %v351
        %v693 = vunpack.c.h.b16 %v351
        %v694 = vunpack.c.l.b16 %v352
        %v695 = vunpack.c.h.b16 %v352
        %v696 = vunpack.c.l.b16 %v353
        %v697 = vunpack.c.h.b16 %v353
        %v698 = vunpack.c.l.b16 %v354
        %v699 = vunpack.c.h.b16 %v354
        %v700 = vunpack.c.l.b16 %v355
        %v701 = vunpack.c.h.b16 %v355
        %v702 = vunpack.c.l.b16 %v356
        %v703 = vunpack.c.h.b16 %v356
        %v704 = vunpack.c.l.b16 %v357
        %v705 = vunpack.c.h.b16 %v357
        %v706 = vunpack.c.l.b16 %v358
        %v707 = vunpack.c.h.b16 %v358
        %v708 = vunpack.c.l.b16 %v359
        %v709 = vunpack.c.h.b16 %v359
        %v710 = vunpack.c.l.b16 %v360
        %v711 = vunpack.c.h.b16 %v360
        %v712 = vunpack.c.l.b16 %v361
        %v713 = vunpack.c.h.b16 %v361
        %v714 = vunpack.c.l.b16 %v362
        %v715 = vunpack.c.h.b16 %v362
        %v716 = vunpack.c.l.b16 %v363
        %v717 = vunpack.c.h.b16 %v363
        %v718 = vunpack.c.l.b16 %v364
        %v719 = vunpack.c.h.b16 %v364
        %v720 = vunpack.c.l.b16 %v365
        %v721 = vunpack.c.h.b16 %v365
        %v722 = vunpack.c.l.b16 %v366
        %v723 = vunpack.c.h.b16 %v366
        %v724 = vunpack.c.l.b16 %v367
        %v725 = vunpack.c.h.b16 %v367
        %v726 = vunpack.c.l.b16 %v368
        %v727 = vunpack.c.h.b16 %v368
        %v728 = vunpack.c.l.b16 %v369
        %v729 = vunpack.c.h.b16 %v369
        %v730 = vunpack.c.l.b16 %v370
        %v731 = vunpack.c.h.b16 %v370
        %v732 = vunpack.c.l.b16 %v371
        %v733 = vunpack.c.h.b16 %v371
        %v734 = vunpack.c.l.b16 %v372
        %v735 = vunpack.c.h.b16 %v372
        %v736 = vunpack.c.l.b16 %v373
        %v737 = vunpack.c.h.b16 %v373
        %v738 = vunpack.c.l.b16 %v374
        %v739 = vunpack.c.h.b16 %v374
        %v740 = vunpack.c.l.b16 %v375
        %v741 = vunpack.c.h.b16 %v375
        %v742 = vunpack.c.l.b16 %v376
        %v743 = vunpack.c.h.b16 %v376
        %v744 = vunpack.c.l.b16 %v377
        %v745 = vunpack.c.h.b16 %v377
        %v746 = vunpack.c.l.b16 %v378
        %v747 = vunpack.c.h.b16 %v378
        %v748 = vunpack.c.l.b16 %v379
        %v749 = vunpack.c.h.b16 %v379
        %v750 = vunpack.c.l.b16 %v380
        %v751 = vunpack.c.h.b16 %v380
        %v752 = vunpack.c.l.b16 %v381
        %v753 = vunpack.c.h.b16 %v381
        %v754 = vunpack.c.l.b16 %v382
        %v755 = vunpack.c.h.b16 %v382
        %v756 = vunpack.c.l.b16 %v383
        %v757 = vunpack.c.h.b16 %v383
        %v758 = vunpack.c.l.b16 %v384
        %v759 = vunpack.c.h.b16 %v384
        %v760 = vunpack.c.l.b16 %v385
        %v761 = vunpack.c.h.b16 %v385
        %v762 = vunpack.c.l.b16 %v386
        %v763 = vunpack.c.h.b16 %v386
        %v764 = vunpack.c.l.b16 %v387
        %v765 = vunpack.c.h.b16 %v387
        %v766 = vunpack.c.l.b16 %v388
        %v767 = vunpack.c.h.b16 %v388
        %v768 = vunpack.c.l.b16 %v389
        %v769 = vunpack.c.h.b16 %v389
        %v770 = vunpack.c.l.b16 %v390
        %v771 = vunpack.c.h.b16 %v390
        %v772 = vunpack.c.l.b16 %v391
        %v773 = vunpack.c.h.b16 %v391
        %v774 = vunpack.c.l.b16 %v392
        %v775 = vunpack.c.h.b16 %v392
        %v776 = vunpack.c.l.b16 %v393
        %v777 = vunpack.c.h.b16 %v393
        %v778 = vunpack.c.l.b16 %v394
        %v779 = vunpack.c.h.b16 %v394
        %v780 = vunpack.c.l.b16 %v395
        %v781 = vunpack.c.h.b16 %v395
        %v782 = vunpack.c.l.b16 %v396
        %v783 = vunpack.c.h.b16 %v396
        %v784 = vunpack.c.l.b16 %v397
        %v785 = vunpack.c.h.b16 %v397
        %v786 = vunpack.c.l.b16 %v398
        %v787 = vunpack.c.h.b16 %v398
        %v788 = vunpack.c.l.b16 %v399
        %v789 = vunpack.c.h.b16 %v399
        %v790 = vunpack.c.l.b16 %v400
        %v791 = vunpack.c.h.b16 %v400
        %v792 = vunpack.c.l.b16 %v401
        %v793 = vunpack.c.h.b16 %v401
        %v794 = vunpack.c.l.b16 %v402
        %v795 = vunpack.c.h.b16 %v402
        %v796 = vunpack.c.l.b16 %v403
        %v797 = vunpack.c.h.b16 %v403
        %v798 = vpack.c.b16 %v550, %v542
        %v799 = vpack.c.b16 %v551, %v543
        %v800 = vpack.c.b16 %v552, %v544
        %v801 = vpack.c.b16 %v553, %v545
        %v802 = vpack.c.b16 %v554, %v546
        %v803 = vpack.c.b16 %v555, %v547
        %v804 = vpack.c.b16 %v556, %v548
        %v805 = vpack.c.b16 %v557, %v549
        %v806 = vpack.c.b16 %v566, %v558
        %v807 = vpack.c.b16 %v567, %v559
        %v808 = vpack.c.b16 %v568, %v560
        %v809 = vpack.c.b16 %v569, %v561
        %v810 = vpack.c.b16 %v570, %v562
        %v811 = vpack.c.b16 %v571, %v563
        %v812 = vpack.c.b16 %v572, %v564
        %v813 = vpack.c.b16 %v573, %v565
        %v814 = vpack.c.b16 %v582, %v574
        %v815 = vpack.c.b16 %v583, %v575
        %v816 = vpack.c.b16 %v584, %v576
        %v817 = vpack.c.b16 %v585, %v577
        %v818 = vpack.c.b16 %v586, %v578
        %v819 = vpack.c.b16 %v587, %v579
        %v820 = vpack.c.b16 %v588, %v580
        %v821 = vpack.c.b16 %v589, %v581
        %v822 = vpack.c.b16 %v598, %v590
        %v823 = vpack.c.b16 %v599, %v591
        %v824 = vpack.c.b16 %v600, %v592
        %v825 = vpack.c.b16 %v601, %v593
        %v826 = vpack.c.b16 %v602, %v594
        %v827 = vpack.c.b16 %v603, %v595
        %v828 = vpack.c.b16 %v604, %v596
        %v829 = vpack.c.b16 %v605, %v597
        %v830 = vpack.c.b16 %v614, %v606
        %v831 = vpack.c.b16 %v615, %v607
        %v832 = vpack.c.b16 %v616, %v608
        %v833 = vpack.c.b16 %v617, %v609
        %v834 = vpack.c.b16 %v618, %v610
        %v835 = vpack.c.b16 %v619, %v611
        %v836 = vpack.c.b16 %v620, %v612
        %v837 = vpack.c.b16 %v621, %v613
        %v838 = vpack.c.b16 %v630, %v622
        %v839 = vpack.c.b16 %v631, %v623
        %v840 = vpack.c.b16 %v632, %v624
        %v841 = vpack.c.b16 %v633, %v625
        %v842 = vpack.c.b16 %v634, %v626
        %v843 = vpack.c.b16 %v635, %v627
        %v844 = vpack.c.b16 %v636, %v628
        %v845 = vpack.c.b16 %v637, %v629
        %v846 = vpack.c.b16 %v646, %v638
        %v847 = vpack.c.b16 %v647, %v639
        %v848 = vpack.c.b16 %v648, %v640
        %v849 = vpack.c.b16 %v649, %v641
        %v850 = vpack.c.b16 %v650, %v642
        %v851 = vpack.c.b16 %v651, %v643
        %v852 = vpack.c.b16 %v652, %v644
        %v853 = vpack.c.b16 %v653, %v645
        %v854 = vpack.c.b16 %v662, %v654
        %v855 = vpack.c.b16 %v663, %v655
        %v856 = vpack.c.b16 %v664, %v656
        %v857 = vpack.c.b16 %v665, %v657
        %v858 = vpack.c.b16 %v666, %v658
        %v859 = vpack.c.b16 %v667, %v659
        %v860 = vpack.c.b16 %v668, %v660
        %v861 = vpack.c.b16 %v669, %v661
        %v862 = vpack.c.b16 %v678, %v670
        %v863 = vpack.c.b16 %v679, %v671
        %v864 = vpack.c.b16 %v680, %v672
        %v865 = vpack.c.b16 %v681, %v673
        %v866 = vpack.c.b16 %v682, %v674
        %v867 = vpack.c.b16 %v683, %v675
        %v868 = vpack.c.b16 %v684, %v676
        %v869 = vpack.c.b16 %v685, %v677
        %v870 = vpack.c.b16 %v694, %v686
        %v871 = vpack.c.b16 %v695, %v687
        %v872 = vpack.c.b16 %v696, %v688
        %v873 = vpack.c.b16 %v697, %v689
        %v874 = vpack.c.b16 %v698, %v690
        %v875 = vpack.c.b16 %v699, %v691
        %v876 = vpack.c.b16 %v700, %v692
        %v877 = vpack.c.b16 %v701, %v693
        %v878 = vpack.c.b16 %v710, %v702
        %v879 = vpack.c.b16 %v711, %v703
        %v880 = vpack.c.b16 %v712, %v704
        %v881 = vpack.c.b16 %v713, %v705
        %v882 = vpack.c.b16 %v714, %v706
        %v883 = vpack.c.b16 %v715, %v707
        %v884 = vpack.c.b16 %v716, %v708
        %v885 = vpack.c.b16 %v717, %v709
        %v886 = vpack.c.b16 %v726, %v718
        %v887 = vpack.c.b16 %v727, %v719
        %v888 = vpack.c.b16 %v728, %v720
        %v889 = vpack.c.b16 %v729, %v721
        %v890 = vpack.c.b16 %v730, %v722
        %v891 = vpack.c.b16 %v731, %v723
        %v892 = vpack.c.b16 %v732, %v724
        %v893 = vpack.c.b16 %v733, %v725
        %v894 = vpack.c.b16 %v742, %v734
        %v895 = vpack.c.b16 %v743, %v735
        %v896 = vpack.c.b16 %v744, %v736
        %v897 = vpack.c.b16 %v745, %v737
        %v898 = vpack.c.b16 %v746, %v738
        %v899 = vpack.c.b16 %v747, %v739
        %v900 = vpack.c.b16 %v748, %v740
        %v901 = vpack.c.b16 %v749, %v741
        %v902 = vpack.c.b16 %v758, %v750
        %v903 = vpack.c.b16 %v759, %v751
        %v904 = vpack.c.b16 %v760, %v752
        %v905 = vpack.c.b16 %v761, %v753
        %v906 = vpack.c.b16 %v762, %v754
        %v907 = vpack.c.b16 %v763, %v755
        %v908 = vpack.c.b16 %v764, %v756
        %v909 = vpack.c.b16 %v765, %v757
        %v910 = vpack.c.b16 %v774, %v766
        %v911 = vpack.c.b16 %v775, %v767
        %v912 = vpack.c.b16 %v776, %v768
        %v913 = vpack.c.b16 %v777, %v769
        %v914 = vpack.c.b16 %v778, %v770
        %v915 = vpack.c.b16 %v779, %v771
        %v916 = vpack.c.b16 %v780, %v772
        %v917 = vpack.c.b16 %v781, %v773
        %v918 = vpack.c.b16 %v790, %v782
        %v919 = vpack.c.b16 %v791, %v783
        %v920 = vpack.c.b16 %v792, %v784
        %v921 = vpack.c.b16 %v793, %v785
        %v922 = vpack.c.b16 %v794, %v786
        %v923 = vpack.c.b16 %v795, %v787
        %v924 = vpack.c.b16 %v796, %v788
        %v925 = vpack.c.b16 %v797, %v789
        %1054 = vmatpush.bf16.msra.mxu0 %v854
        %1055 = vmatpush.bf16.msra.mxu0 %v846
        %1056 = vmatpush.bf16.msra.mxu0 %v838
        %1057 = vmatpush.bf16.msra.mxu0 %v830
        %1058 = vmatpush.bf16.msra.mxu0 %v822
        %1059 = vmatpush.bf16.msra.mxu0 %v814
        %1060 = vmatpush.bf16.msra.mxu0 %v806
        %1061 = vmatpush.bf16.msra.mxu0 %v798
        %1062 = vmatmul.bf16.gmra.mxu0 %v410
        %v1063 = vpop.f32.mrf.mxu0
        %v1064 = vadd.f32 0.0, %v1063
        %v1065 = vpop.f32.mrf.mxu0
        %v1066 = vadd.f32 0.0, %v1065
        %1067 = vdwg.mxu0
        %1068 = vmatpush.bf16.msra.mxu0 %v918
        %1069 = vmatpush.bf16.msra.mxu0 %v910
        %1070 = vmatpush.bf16.msra.mxu0 %v902
        %1071 = vmatpush.bf16.msra.mxu0 %v894
        %1072 = vmatpush.bf16.msra.mxu0 %v886
        %1073 = vmatpush.bf16.msra.mxu0 %v878
        %1074 = vmatpush.bf16.msra.mxu0 %v870
        %1075 = vmatpush.bf16.msra.mxu0 %v862
        %1076 = vmatmul.bf16.gmra.mxu0 %v411
        %v1077 = vpop.f32.mrf.mxu0
        %v1078 = vadd.f32 %v1064, %v1077
        %v1079 = vpop.f32.mrf.mxu0
        %v1080 = vadd.f32 %v1066, %v1079
        %1081 = vdwg.mxu0
        %1082 = vmatpush.bf16.msra.mxu0 %v855
        %1083 = vmatpush.bf16.msra.mxu0 %v847
        %1084 = vmatpush.bf16.msra.mxu0 %v839
        %1085 = vmatpush.bf16.msra.mxu0 %v831
        %1086 = vmatpush.bf16.msra.mxu0 %v823
        %1087 = vmatpush.bf16.msra.mxu0 %v815
        %1088 = vmatpush.bf16.msra.mxu0 %v807
        %1089 = vmatpush.bf16.msra.mxu0 %v799
        %1090 = vmatmul.bf16.gmra.mxu0 %v410
        %v1091 = vpop.f32.mrf.mxu0
        %v1092 = vadd.f32 0.0, %v1091
        %v1093 = vpop.f32.mrf.mxu0
        %v1094 = vadd.f32 0.0, %v1093
        %1095 = vdwg.mxu0
        %1096 = vmatpush.bf16.msra.mxu0 %v919
        %1097 = vmatpush.bf16.msra.mxu0 %v911
        %1098 = vmatpush.bf16.msra.mxu0 %v903
        %1099 = vmatpush.bf16.msra.mxu0 %v895
        %1100 = vmatpush.bf16.msra.mxu0 %v887
        %1101 = vmatpush.bf16.msra.mxu0 %v879
        %1102 = vmatpush.bf16.msra.mxu0 %v871
        %1103 = vmatpush.bf16.msra.mxu0 %v863
        %1104 = vmatmul.bf16.gmra.mxu0 %v411
        %v1105 = vpop.f32.mrf.mxu0
        %v1106 = vadd.f32 %v1092, %v1105
        %v1107 = vpop.f32.mrf.mxu0
        %v1108 = vadd.f32 %v1094, %v1107
        %1109 = vdwg.mxu0
        %1110 = vmatpush.bf16.msra.mxu0 %v856
        %1111 = vmatpush.bf16.msra.mxu0 %v848
        %1112 = vmatpush.bf16.msra.mxu0 %v840
        %1113 = vmatpush.bf16.msra.mxu0 %v832
        %1114 = vmatpush.bf16.msra.mxu0 %v824
        %1115 = vmatpush.bf16.msra.mxu0 %v816
        %1116 = vmatpush.bf16.msra.mxu0 %v808
        %1117 = vmatpush.bf16.msra.mxu0 %v800
        %1118 = vmatmul.bf16.gmra.mxu0 %v410
        %v1119 = vpop.f32.mrf.mxu0
        %v1120 = vadd.f32 0.0, %v1119
        %v1121 = vpop.f32.mrf.mxu0
        %v1122 = vadd.f32 0.0, %v1121
        %1123 = vdwg.mxu0
        %1124 = vmatpush.bf16.msra.mxu0 %v920
        %1125 = vmatpush.bf16.msra.mxu0 %v912
        %1126 = vmatpush.bf16.msra.mxu0 %v904
        %1127 = vmatpush.bf16.msra.mxu0 %v896
        %1128 = vmatpush.bf16.msra.mxu0 %v888
        %1129 = vmatpush.bf16.msra.mxu0 %v880
        %1130 = vmatpush.bf16.msra.mxu0 %v872
        %1131 = vmatpush.bf16.msra.mxu0 %v864
        %1132 = vmatmul.bf16.gmra.mxu0 %v411
        %v1133 = vpop.f32.mrf.mxu0
        %v1134 = vadd.f32 %v1120, %v1133
        %v1135 = vpop.f32.mrf.mxu0
        %v1136 = vadd.f32 %v1122, %v1135
        %1137 = vdwg.mxu0
        %1138 = vmatpush.bf16.msra.mxu0 %v857
        %1139 = vmatpush.bf16.msra.mxu0 %v849
        %1140 = vmatpush.bf16.msra.mxu0 %v841
        %1141 = vmatpush.bf16.msra.mxu0 %v833
        %1142 = vmatpush.bf16.msra.mxu0 %v825
        %1143 = vmatpush.bf16.msra.mxu0 %v817
        %1144 = vmatpush.bf16.msra.mxu0 %v809
        %1145 = vmatpush.bf16.msra.mxu0 %v801
        %1146 = vmatmul.bf16.gmra.mxu0 %v410
        %v1147 = vpop.f32.mrf.mxu0
        %v1148 = vadd.f32 0.0, %v1147
        %v1149 = vpop.f32.mrf.mxu0
        %v1150 = vadd.f32 0.0, %v1149
        %1151 = vdwg.mxu0
        %1152 = vmatpush.bf16.msra.mxu0 %v921
        %1153 = vmatpush.bf16.msra.mxu0 %v913
        %1154 = vmatpush.bf16.msra.mxu0 %v905
        %1155 = vmatpush.bf16.msra.mxu0 %v897
        %1156 = vmatpush.bf16.msra.mxu0 %v889
        %1157 = vmatpush.bf16.msra.mxu0 %v881
        %1158 = vmatpush.bf16.msra.mxu0 %v873
        %1159 = vmatpush.bf16.msra.mxu0 %v865
        %1160 = vmatmul.bf16.gmra.mxu0 %v411
        %v1161 = vpop.f32.mrf.mxu0
        %v1162 = vadd.f32 %v1148, %v1161
        %v1163 = vpop.f32.mrf.mxu0
        %v1164 = vadd.f32 %v1150, %v1163
        %1165 = vdwg.mxu0
        %1166 = vmatpush.bf16.msra.mxu0 %v858
        %1167 = vmatpush.bf16.msra.mxu0 %v850
        %1168 = vmatpush.bf16.msra.mxu0 %v842
        %1169 = vmatpush.bf16.msra.mxu0 %v834
        %1170 = vmatpush.bf16.msra.mxu0 %v826
        %1171 = vmatpush.bf16.msra.mxu0 %v818
        %1172 = vmatpush.bf16.msra.mxu0 %v810
        %1173 = vmatpush.bf16.msra.mxu0 %v802
        %1174 = vmatmul.bf16.gmra.mxu0 %v410
        %v1175 = vpop.f32.mrf.mxu0
        %v1176 = vadd.f32 0.0, %v1175
        %v1177 = vpop.f32.mrf.mxu0
        %v1178 = vadd.f32 0.0, %v1177
        %1179 = vdwg.mxu0
        %1180 = vmatpush.bf16.msra.mxu0 %v922
        %1181 = vmatpush.bf16.msra.mxu0 %v914
        %1182 = vmatpush.bf16.msra.mxu0 %v906
        %1183 = vmatpush.bf16.msra.mxu0 %v898
        %1184 = vmatpush.bf16.msra.mxu0 %v890
        %1185 = vmatpush.bf16.msra.mxu0 %v882
        %1186 = vmatpush.bf16.msra.mxu0 %v874
        %1187 = vmatpush.bf16.msra.mxu0 %v866
        %1188 = vmatmul.bf16.gmra.mxu0 %v411
        %v1189 = vpop.f32.mrf.mxu0
        %v1190 = vadd.f32 %v1176, %v1189
        %v1191 = vpop.f32.mrf.mxu0
        %v1192 = vadd.f32 %v1178, %v1191
        %1193 = vdwg.mxu0
        %1194 = vmatpush.bf16.msra.mxu0 %v859
        %1195 = vmatpush.bf16.msra.mxu0 %v851
        %1196 = vmatpush.bf16.msra.mxu0 %v843
        %1197 = vmatpush.bf16.msra.mxu0 %v835
        %1198 = vmatpush.bf16.msra.mxu0 %v827
        %1199 = vmatpush.bf16.msra.mxu0 %v819
        %1200 = vmatpush.bf16.msra.mxu0 %v811
        %1201 = vmatpush.bf16.msra.mxu0 %v803
        %1202 = vmatmul.bf16.gmra.mxu0 %v410
        %v1203 = vpop.f32.mrf.mxu0
        %v1204 = vadd.f32 0.0, %v1203
        %v1205 = vpop.f32.mrf.mxu0
        %v1206 = vadd.f32 0.0, %v1205
        %1207 = vdwg.mxu0
        %1208 = vmatpush.bf16.msra.mxu0 %v923
        %1209 = vmatpush.bf16.msra.mxu0 %v915
        %1210 = vmatpush.bf16.msra.mxu0 %v907
        %1211 = vmatpush.bf16.msra.mxu0 %v899
        %1212 = vmatpush.bf16.msra.mxu0 %v891
        %1213 = vmatpush.bf16.msra.mxu0 %v883
        %1214 = vmatpush.bf16.msra.mxu0 %v875
        %1215 = vmatpush.bf16.msra.mxu0 %v867
        %1216 = vmatmul.bf16.gmra.mxu0 %v411
        %v1217 = vpop.f32.mrf.mxu0
        %v1218 = vadd.f32 %v1204, %v1217
        %v1219 = vpop.f32.mrf.mxu0
        %v1220 = vadd.f32 %v1206, %v1219
        %1221 = vdwg.mxu0
        %1222 = vmatpush.bf16.msra.mxu0 %v860
        %1223 = vmatpush.bf16.msra.mxu0 %v852
        %1224 = vmatpush.bf16.msra.mxu0 %v844
        %1225 = vmatpush.bf16.msra.mxu0 %v836
        %1226 = vmatpush.bf16.msra.mxu0 %v828
        %1227 = vmatpush.bf16.msra.mxu0 %v820
        %1228 = vmatpush.bf16.msra.mxu0 %v812
        %1229 = vmatpush.bf16.msra.mxu0 %v804
        %1230 = vmatmul.bf16.gmra.mxu0 %v410
        %v1231 = vpop.f32.mrf.mxu0
        %v1232 = vadd.f32 0.0, %v1231
        %v1233 = vpop.f32.mrf.mxu0
        %v1234 = vadd.f32 0.0, %v1233
        %1235 = vdwg.mxu0
        %1236 = vmatpush.bf16.msra.mxu0 %v924
        %1237 = vmatpush.bf16.msra.mxu0 %v916
        %1238 = vmatpush.bf16.msra.mxu0 %v908
        %1239 = vmatpush.bf16.msra.mxu0 %v900
        %1240 = vmatpush.bf16.msra.mxu0 %v892
        %1241 = vmatpush.bf16.msra.mxu0 %v884
        %1242 = vmatpush.bf16.msra.mxu0 %v876
        %1243 = vmatpush.bf16.msra.mxu0 %v868
        %1244 = vmatmul.bf16.gmra.mxu0 %v411
        %v1245 = vpop.f32.mrf.mxu0
        %v1246 = vadd.f32 %v1232, %v1245
        %v1247 = vpop.f32.mrf.mxu0
        %v1248 = vadd.f32 %v1234, %v1247
        %1249 = vdwg.mxu0
        %1250 = vmatpush.bf16.msra.mxu0 %v861
        %1251 = vmatpush.bf16.msra.mxu0 %v853
        %1252 = vmatpush.bf16.msra.mxu0 %v845
        %1253 = vmatpush.bf16.msra.mxu0 %v837
        %1254 = vmatpush.bf16.msra.mxu0 %v829
        %1255 = vmatpush.bf16.msra.mxu0 %v821
        %1256 = vmatpush.bf16.msra.mxu0 %v813
        %1257 = vmatpush.bf16.msra.mxu0 %v805
        %1258 = vmatmul.bf16.gmra.mxu0 %v410
        %v1259 = vpop.f32.mrf.mxu0
        %v1260 = vadd.f32 0.0, %v1259
        %v1261 = vpop.f32.mrf.mxu0
        %v1262 = vadd.f32 0.0, %v1261
        %1263 = vdwg.mxu0
        %1264 = vmatpush.bf16.msra.mxu0 %v925
        %1265 = vmatpush.bf16.msra.mxu0 %v917
        %1266 = vmatpush.bf16.msra.mxu0 %v909
        %1267 = vmatpush.bf16.msra.mxu0 %v901
        %1268 = vmatpush.bf16.msra.mxu0 %v893
        %1269 = vmatpush.bf16.msra.mxu0 %v885
        %1270 = vmatpush.bf16.msra.mxu0 %v877
        %1271 = vmatpush.bf16.msra.mxu0 %v869
        %1272 = vmatmul.bf16.gmra.mxu0 %v411
        %v1273 = vpop.f32.mrf.mxu0
        %v1274 = vadd.f32 %v1260, %v1273
        %v1275 = vpop.f32.mrf.mxu0
        %v1276 = vadd.f32 %v1262, %v1275
        %1277 = vdwg.mxu0
        %v1278 = vxor.u32 %v1078, 2147483648
        %v1279 = vxor.u32 %v1106, 2147483648
        %v1280 = vxor.u32 %v1134, 2147483648
        %v1281 = vxor.u32 %v1162, 2147483648
        %v1282 = vxor.u32 %v1080, 2147483648
        %v1283 = vxor.u32 %v1108, 2147483648
        %v1284 = vxor.u32 %v1136, 2147483648
        %v1285 = vxor.u32 %v1164, 2147483648
        %v1286 = vmul.f32 %v1278, 1.442695
        %v1287 = vpow.pop %v1286
        %v1288 = vmul.f32 %v1279, 1.442695
        %v1289 = vpow.pop %v1288
        %v1290 = vmul.f32 %v1280, 1.442695
        %v1291 = vpow.pop %v1290
        %v1292 = vmul.f32 %v1281, 1.442695
        %v1293 = vpow.pop %v1292
        %v1294 = vmul.f32 %v1282, 1.442695
        %v1295 = vpow.pop %v1294
        %v1296 = vmul.f32 %v1283, 1.442695
        %v1297 = vpow.pop %v1296
        %v1298 = vmul.f32 %v1284, 1.442695
        %v1299 = vpow.pop %v1298
        %v1300 = vmul.f32 %v1285, 1.442695
        %v1301 = vpow.pop %v1300
        %v1302 = vadd.f32 %v1287, 1.0
        %v1303 = vadd.f32 %v1289, 1.0
        %v1304 = vadd.f32 %v1291, 1.0
        %v1305 = vadd.f32 %v1293, 1.0
        %v1306 = vadd.f32 %v1295, 1.0
        %v1307 = vadd.f32 %v1297, 1.0
        %v1308 = vadd.f32 %v1299, 1.0
        %v1309 = vadd.f32 %v1301, 1.0
        %v1310 = vrcp.pop %v1302
        %v1311 = vmul.f32 %v1302, %v1310
        %v1312 = vsub.f32 1.0, %v1311
        %v1313 = vmul.f32 %v1310, %v1312
        %v1314 = vadd.f32 %v1310, %v1313
        %vm1315 = vweird.f32 %v1302
        %vm1316 = vweird.f32 %v1310
        %vm1317 = vmor %vm1315, %vm1316
        %v1318 = vsel %vm1317, %v1310, %v1314
        %v1319 = vand.u32 2147483647, %v1302
        %vm1320 = vcmp.eq.f32.partialorder %v1319, 8.507059e+37
        %v1321 = vand.u32 %v1302, 2147483648
        %v1322 = vor.u32 1.1754944e-38, %v1321
        %v1323 = vsel %vm1320, %v1322, %v1318
        %v1324 = vmul.f32 1.0, %v1323
        %v1325 = vrcp.pop %v1303
        %v1326 = vmul.f32 %v1303, %v1325
        %v1327 = vsub.f32 1.0, %v1326
        %v1328 = vmul.f32 %v1325, %v1327
        %v1329 = vadd.f32 %v1325, %v1328
        %vm1330 = vweird.f32 %v1303
        %vm1331 = vweird.f32 %v1325
        %vm1332 = vmor %vm1330, %vm1331
        %v1333 = vsel %vm1332, %v1325, %v1329
        %v1334 = vand.u32 2147483647, %v1303
        %vm1335 = vcmp.eq.f32.partialorder %v1334, 8.507059e+37
        %v1336 = vand.u32 %v1303, 2147483648
        %v1337 = vor.u32 1.1754944e-38, %v1336
        %v1338 = vsel %vm1335, %v1337, %v1333
        %v1339 = vmul.f32 1.0, %v1338
        %v1340 = vrcp.pop %v1304
        %v1341 = vmul.f32 %v1304, %v1340
        %v1342 = vsub.f32 1.0, %v1341
        %v1343 = vmul.f32 %v1340, %v1342
        %v1344 = vadd.f32 %v1340, %v1343
        %vm1345 = vweird.f32 %v1304
        %vm1346 = vweird.f32 %v1340
        %vm1347 = vmor %vm1345, %vm1346
        %v1348 = vsel %vm1347, %v1340, %v1344
        %v1349 = vand.u32 2147483647, %v1304
        %vm1350 = vcmp.eq.f32.partialorder %v1349, 8.507059e+37
        %v1351 = vand.u32 %v1304, 2147483648
        %v1352 = vor.u32 1.1754944e-38, %v1351
        %v1353 = vsel %vm1350, %v1352, %v1348
        %v1354 = vmul.f32 1.0, %v1353
        %v1355 = vrcp.pop %v1305
        %v1356 = vmul.f32 %v1305, %v1355
        %v1357 = vsub.f32 1.0, %v1356
        %v1358 = vmul.f32 %v1355, %v1357
        %v1359 = vadd.f32 %v1355, %v1358
        %vm1360 = vweird.f32 %v1305
        %vm1361 = vweird.f32 %v1355
        %vm1362 = vmor %vm1360, %vm1361
        %v1363 = vsel %vm1362, %v1355, %v1359
        %v1364 = vand.u32 2147483647, %v1305
        %vm1365 = vcmp.eq.f32.partialorder %v1364, 8.507059e+37
        %v1366 = vand.u32 %v1305, 2147483648
        %v1367 = vor.u32 1.1754944e-38, %v1366
        %v1368 = vsel %vm1365, %v1367, %v1363
        %v1369 = vmul.f32 1.0, %v1368
        %v1370 = vrcp.pop %v1306
        %v1371 = vmul.f32 %v1306, %v1370
        %v1372 = vsub.f32 1.0, %v1371
        %v1373 = vmul.f32 %v1370, %v1372
        %v1374 = vadd.f32 %v1370, %v1373
        %vm1375 = vweird.f32 %v1306
        %vm1376 = vweird.f32 %v1370
        %vm1377 = vmor %vm1375, %vm1376
        %v1378 = vsel %vm1377, %v1370, %v1374
        %v1379 = vand.u32 2147483647, %v1306
        %vm1380 = vcmp.eq.f32.partialorder %v1379, 8.507059e+37
        %v1381 = vand.u32 %v1306, 2147483648
        %v1382 = vor.u32 1.1754944e-38, %v1381
        %v1383 = vsel %vm1380, %v1382, %v1378
        %v1384 = vmul.f32 1.0, %v1383
        %v1385 = vrcp.pop %v1307
        %v1386 = vmul.f32 %v1307, %v1385
        %v1387 = vsub.f32 1.0, %v1386
        %v1388 = vmul.f32 %v1385, %v1387
        %v1389 = vadd.f32 %v1385, %v1388
        %vm1390 = vweird.f32 %v1307
        %vm1391 = vweird.f32 %v1385
        %vm1392 = vmor %vm1390, %vm1391
        %v1393 = vsel %vm1392, %v1385, %v1389
        %v1394 = vand.u32 2147483647, %v1307
        %vm1395 = vcmp.eq.f32.partialorder %v1394, 8.507059e+37
        %v1396 = vand.u32 %v1307, 2147483648
        %v1397 = vor.u32 1.1754944e-38, %v1396
        %v1398 = vsel %vm1395, %v1397, %v1393
        %v1399 = vmul.f32 1.0, %v1398
        %v1400 = vrcp.pop %v1308
        %v1401 = vmul.f32 %v1308, %v1400
        %v1402 = vsub.f32 1.0, %v1401
        %v1403 = vmul.f32 %v1400, %v1402
        %v1404 = vadd.f32 %v1400, %v1403
        %vm1405 = vweird.f32 %v1308
        %vm1406 = vweird.f32 %v1400
        %vm1407 = vmor %vm1405, %vm1406
        %v1408 = vsel %vm1407, %v1400, %v1404
        %v1409 = vand.u32 2147483647, %v1308
        %vm1410 = vcmp.eq.f32.partialorder %v1409, 8.507059e+37
        %v1411 = vand.u32 %v1308, 2147483648
        %v1412 = vor.u32 1.1754944e-38, %v1411
        %v1413 = vsel %vm1410, %v1412, %v1408
        %v1414 = vmul.f32 1.0, %v1413
        %v1415 = vrcp.pop %v1309
        %v1416 = vmul.f32 %v1309, %v1415
        %v1417 = vsub.f32 1.0, %v1416
        %v1418 = vmul.f32 %v1415, %v1417
        %v1419 = vadd.f32 %v1415, %v1418
        %vm1420 = vweird.f32 %v1309
        %vm1421 = vweird.f32 %v1415
        %vm1422 = vmor %vm1420, %vm1421
        %v1423 = vsel %vm1422, %v1415, %v1419
        %v1424 = vand.u32 2147483647, %v1309
        %vm1425 = vcmp.eq.f32.partialorder %v1424, 8.507059e+37
        %v1426 = vand.u32 %v1309, 2147483648
        %v1427 = vor.u32 1.1754944e-38, %v1426
        %v1428 = vsel %vm1425, %v1427, %v1423
        %v1429 = vmul.f32 1.0, %v1428
        %v1430 = vmul.f32 %v1078, %v1324
        %v1431 = vmul.f32 %v1106, %v1339
        %v1432 = vmul.f32 %v1134, %v1354
        %v1433 = vmul.f32 %v1162, %v1369
        %v1434 = vmul.f32 %v1080, %v1384
        %v1435 = vmul.f32 %v1108, %v1399
        %v1436 = vmul.f32 %v1136, %v1414
        %v1437 = vmul.f32 %v1164, %v1429
        %v1438 = vmul.f32 %v1430, %v1190
        %v1439 = vmul.f32 %v1431, %v1218
        %v1440 = vmul.f32 %v1432, %v1246
        %v1441 = vmul.f32 %v1433, %v1274
        %v1442 = vmul.f32 %v1434, %v1192
        %v1443 = vmul.f32 %v1435, %v1220
        %v1444 = vmul.f32 %v1436, %v1248
        %v1445 = vmul.f32 %v1437, %v1276
        %v1446 = vld [vmem:[#allocation2] sm:$0xff]
        %v1447 = vld [vmem:[#allocation2 + $0x8] sm:$0xff]
        %v1448 = vpack.c.bf16 %v1442, %v1438
        %v1449 = vpack.c.bf16 %v1443, %v1439
        %v1450 = vpack.c.bf16 %v1444, %v1440
        %v1451 = vpack.c.bf16 %v1445, %v1441
        %v1452 = vld [vmem:[%s240] sm:$0xf]
        %v1453 = vld [vmem:[%s240 + $0x4] sm:$0xf]
        %v1454 = vld [vmem:[%s240 + $0x8] sm:$0xf]
        %v1455 = vld [vmem:[%s240 + $0xc] sm:$0xf]
        %v1456 = vld [vmem:[%s240 + $0x10] sm:$0xf]
        %v1457 = vld [vmem:[%s240 + $0x14] sm:$0xf]
        %v1458 = vld [vmem:[%s240 + $0x18] sm:$0xf]
        %v1459 = vld [vmem:[%s240 + $0x1c] sm:$0xf]
        %v1460 = vld [vmem:[%s240 + $0x20] sm:$0xf]
        %v1461 = vld [vmem:[%s240 + $0x24] sm:$0xf]
        %v1462 = vld [vmem:[%s240 + $0x28] sm:$0xf]
        %v1463 = vld [vmem:[%s240 + $0x2c] sm:$0xf]
        %v1464 = vld [vmem:[%s240 + $0x30] sm:$0xf]
        %v1465 = vld [vmem:[%s240 + $0x34] sm:$0xf]
        %v1466 = vld [vmem:[%s240 + $0x38] sm:$0xf]
        %v1467 = vld [vmem:[%s240 + $0x3c] sm:$0xf]
        %v1468 = vld [vmem:[%s240 + $0x40] sm:$0xf]
        %v1469 = vld [vmem:[%s240 + $0x44] sm:$0xf]
        %v1470 = vld [vmem:[%s240 + $0x48] sm:$0xf]
        %v1471 = vld [vmem:[%s240 + $0x4c] sm:$0xf]
        %v1472 = vld [vmem:[%s240 + $0x50] sm:$0xf]
        %v1473 = vld [vmem:[%s240 + $0x54] sm:$0xf]
        %v1474 = vld [vmem:[%s240 + $0x58] sm:$0xf]
        %v1475 = vld [vmem:[%s240 + $0x5c] sm:$0xf]
        %v1476 = vld [vmem:[%s240 + $0x60] sm:$0xf]
        %v1477 = vld [vmem:[%s240 + $0x64] sm:$0xf]
        %v1478 = vld [vmem:[%s240 + $0x68] sm:$0xf]
        %v1479 = vld [vmem:[%s240 + $0x6c] sm:$0xf]
        %v1480 = vld [vmem:[%s240 + $0x70] sm:$0xf]
        %v1481 = vld [vmem:[%s240 + $0x74] sm:$0xf]
        %v1482 = vld [vmem:[%s240 + $0x78] sm:$0xf]
        %v1483 = vld [vmem:[%s240 + $0x7c] sm:$0xf]
        %v1484 = vld [vmem:[%s240 + $0x80] sm:$0xf]
        %v1485 = vld [vmem:[%s240 + $0x84] sm:$0xf]
        %v1486 = vld [vmem:[%s240 + $0x88] sm:$0xf]
        %v1487 = vld [vmem:[%s240 + $0x8c] sm:$0xf]
        %v1488 = vld [vmem:[%s240 + $0x90] sm:$0xf]
        %v1489 = vld [vmem:[%s240 + $0x94] sm:$0xf]
        %v1490 = vld [vmem:[%s240 + $0x98] sm:$0xf]
        %v1491 = vld [vmem:[%s240 + $0x9c] sm:$0xf]
        %v1492 = vld [vmem:[%s240 + $0xa0] sm:$0xf]
        %v1493 = vld [vmem:[%s240 + $0xa4] sm:$0xf]
        %v1494 = vld [vmem:[%s240 + $0xa8] sm:$0xf]
        %v1495 = vld [vmem:[%s240 + $0xac] sm:$0xf]
        %v1496 = vld [vmem:[%s240 + $0xb0] sm:$0xf]
        %v1497 = vld [vmem:[%s240 + $0xb4] sm:$0xf]
        %v1498 = vld [vmem:[%s240 + $0xb8] sm:$0xf]
        %v1499 = vld [vmem:[%s240 + $0xbc] sm:$0xf]
        %v1500 = vld [vmem:[%s240 + $0xc0] sm:$0xf]
        %v1501 = vld [vmem:[%s240 + $0xc4] sm:$0xf]
        %v1502 = vld [vmem:[%s240 + $0xc8] sm:$0xf]
        %v1503 = vld [vmem:[%s240 + $0xcc] sm:$0xf]
        %v1504 = vld [vmem:[%s240 + $0xd0] sm:$0xf]
        %v1505 = vld [vmem:[%s240 + $0xd4] sm:$0xf]
        %v1506 = vld [vmem:[%s240 + $0xd8] sm:$0xf]
        %v1507 = vld [vmem:[%s240 + $0xdc] sm:$0xf]
        %v1508 = vld [vmem:[%s240 + $0xe0] sm:$0xf]
        %v1509 = vld [vmem:[%s240 + $0xe4] sm:$0xf]
        %v1510 = vld [vmem:[%s240 + $0xe8] sm:$0xf]
        %v1511 = vld [vmem:[%s240 + $0xec] sm:$0xf]
        %v1512 = vld [vmem:[%s240 + $0xf0] sm:$0xf]
        %v1513 = vld [vmem:[%s240 + $0xf4] sm:$0xf]
        %v1514 = vld [vmem:[%s240 + $0xf8] sm:$0xf]
        %v1515 = vld [vmem:[%s240 + $0xfc] sm:$0xf]
        %v1580 = vunpack.c.l.b16 %v1452
        %v1581 = vunpack.c.l.b16 %v1453
        %v1582 = vunpack.c.l.b16 %v1454
        %v1583 = vunpack.c.l.b16 %v1455
        %v1584 = vunpack.c.l.b16 %v1456
        %v1585 = vunpack.c.l.b16 %v1457
        %v1586 = vunpack.c.l.b16 %v1458
        %v1587 = vunpack.c.l.b16 %v1459
        %v1588 = vunpack.c.l.b16 %v1460
        %v1589 = vunpack.c.l.b16 %v1461
        %v1590 = vunpack.c.l.b16 %v1462
        %v1591 = vunpack.c.l.b16 %v1463
        %v1592 = vunpack.c.l.b16 %v1464
        %v1593 = vunpack.c.l.b16 %v1465
        %v1594 = vunpack.c.l.b16 %v1466
        %v1595 = vunpack.c.l.b16 %v1467
        %v1596 = vunpack.c.l.b16 %v1468
        %v1597 = vunpack.c.l.b16 %v1469
        %v1598 = vunpack.c.l.b16 %v1470
        %v1599 = vunpack.c.l.b16 %v1471
        %v1600 = vunpack.c.l.b16 %v1472
        %v1601 = vunpack.c.l.b16 %v1473
        %v1602 = vunpack.c.l.b16 %v1474
        %v1603 = vunpack.c.l.b16 %v1475
        %v1604 = vunpack.c.l.b16 %v1476
        %v1605 = vunpack.c.l.b16 %v1477
        %v1606 = vunpack.c.l.b16 %v1478
        %v1607 = vunpack.c.l.b16 %v1479
        %v1608 = vunpack.c.l.b16 %v1480
        %v1609 = vunpack.c.l.b16 %v1481
        %v1610 = vunpack.c.l.b16 %v1482
        %v1611 = vunpack.c.l.b16 %v1483
        %v1612 = vunpack.c.l.b16 %v1484
        %v1613 = vunpack.c.l.b16 %v1485
        %v1614 = vunpack.c.l.b16 %v1486
        %v1615 = vunpack.c.l.b16 %v1487
        %v1616 = vunpack.c.l.b16 %v1488
        %v1617 = vunpack.c.l.b16 %v1489
        %v1618 = vunpack.c.l.b16 %v1490
        %v1619 = vunpack.c.l.b16 %v1491
        %v1620 = vunpack.c.l.b16 %v1492
        %v1621 = vunpack.c.l.b16 %v1493
        %v1622 = vunpack.c.l.b16 %v1494
        %v1623 = vunpack.c.l.b16 %v1495
        %v1624 = vunpack.c.l.b16 %v1496
        %v1625 = vunpack.c.l.b16 %v1497
        %v1626 = vunpack.c.l.b16 %v1498
        %v1627 = vunpack.c.l.b16 %v1499
        %v1628 = vunpack.c.l.b16 %v1500
        %v1629 = vunpack.c.l.b16 %v1501
        %v1630 = vunpack.c.l.b16 %v1502
        %v1631 = vunpack.c.l.b16 %v1503
        %v1632 = vunpack.c.l.b16 %v1504
        %v1633 = vunpack.c.l.b16 %v1505
        %v1634 = vunpack.c.l.b16 %v1506
        %v1635 = vunpack.c.l.b16 %v1507
        %v1636 = vunpack.c.l.b16 %v1508
        %v1637 = vunpack.c.l.b16 %v1509
        %v1638 = vunpack.c.l.b16 %v1510
        %v1639 = vunpack.c.l.b16 %v1511
        %v1640 = vunpack.c.l.b16 %v1512
        %v1641 = vunpack.c.l.b16 %v1513
        %v1642 = vunpack.c.l.b16 %v1514
        %v1643 = vunpack.c.l.b16 %v1515
        %v1644 = vpack.c.b16 %v1581, %v1580
        %v1645 = vpack.c.b16 %v1583, %v1582
        %v1646 = vpack.c.b16 %v1585, %v1584
        %v1647 = vpack.c.b16 %v1587, %v1586
        %v1648 = vpack.c.b16 %v1589, %v1588
        %v1649 = vpack.c.b16 %v1591, %v1590
        %v1650 = vpack.c.b16 %v1593, %v1592
        %v1651 = vpack.c.b16 %v1595, %v1594
        %v1652 = vpack.c.b16 %v1597, %v1596
        %v1653 = vpack.c.b16 %v1599, %v1598
        %v1654 = vpack.c.b16 %v1601, %v1600
        %v1655 = vpack.c.b16 %v1603, %v1602
        %v1656 = vpack.c.b16 %v1605, %v1604
        %v1657 = vpack.c.b16 %v1607, %v1606
        %v1658 = vpack.c.b16 %v1609, %v1608
        %v1659 = vpack.c.b16 %v1611, %v1610
        %v1660 = vpack.c.b16 %v1613, %v1612
        %v1661 = vpack.c.b16 %v1615, %v1614
        %v1662 = vpack.c.b16 %v1617, %v1616
        %v1663 = vpack.c.b16 %v1619, %v1618
        %v1664 = vpack.c.b16 %v1621, %v1620
        %v1665 = vpack.c.b16 %v1623, %v1622
        %v1666 = vpack.c.b16 %v1625, %v1624
        %v1667 = vpack.c.b16 %v1627, %v1626
        %v1668 = vpack.c.b16 %v1629, %v1628
        %v1669 = vpack.c.b16 %v1631, %v1630
        %v1670 = vpack.c.b16 %v1633, %v1632
        %v1671 = vpack.c.b16 %v1635, %v1634
        %v1672 = vpack.c.b16 %v1637, %v1636
        %v1673 = vpack.c.b16 %v1639, %v1638
        %v1674 = vpack.c.b16 %v1641, %v1640
        %v1675 = vpack.c.b16 %v1643, %v1642
        %1708 = vmatpush.bf16.msra.mxu0 %v1651
        %1709 = vmatpush.bf16.msra.mxu0 %v1650
        %1710 = vmatpush.bf16.msra.mxu0 %v1649
        %1711 = vmatpush.bf16.msra.mxu0 %v1648
        %1712 = vmatpush.bf16.msra.mxu0 %v1647
        %1713 = vmatpush.bf16.msra.mxu0 %v1646
        %1714 = vmatpush.bf16.msra.mxu0 %v1645
        %1715 = vmatpush.bf16.msra.mxu0 %v1644
        %1716 = vmatmul.bf16.gmra.mxu0 %v1448
        %v1717 = vpop.f32.mrf.mxu0
        %v1718 = vadd.f32 0.0, %v1717
        %v1719 = vpop.f32.mrf.mxu0
        %v1720 = vadd.f32 0.0, %v1719
        %1721 = vdwg.mxu0
        %1722 = vmatpush.bf16.msra.mxu0 %v1659
        %1723 = vmatpush.bf16.msra.mxu0 %v1658
        %1724 = vmatpush.bf16.msra.mxu0 %v1657
        %1725 = vmatpush.bf16.msra.mxu0 %v1656
        %1726 = vmatpush.bf16.msra.mxu0 %v1655
        %1727 = vmatpush.bf16.msra.mxu0 %v1654
        %1728 = vmatpush.bf16.msra.mxu0 %v1653
        %1729 = vmatpush.bf16.msra.mxu0 %v1652
        %1730 = vmatmul.bf16.gmra.mxu0 %v1449
        %v1731 = vpop.f32.mrf.mxu0
        %v1732 = vadd.f32 %v1718, %v1731
        %v1733 = vpop.f32.mrf.mxu0
        %v1734 = vadd.f32 %v1720, %v1733
        %1735 = vdwg.mxu0
        %1736 = vmatpush.bf16.msra.mxu0 %v1667
        %1737 = vmatpush.bf16.msra.mxu0 %v1666
        %1738 = vmatpush.bf16.msra.mxu0 %v1665
        %1739 = vmatpush.bf16.msra.mxu0 %v1664
        %1740 = vmatpush.bf16.msra.mxu0 %v1663
        %1741 = vmatpush.bf16.msra.mxu0 %v1662
        %1742 = vmatpush.bf16.msra.mxu0 %v1661
        %1743 = vmatpush.bf16.msra.mxu0 %v1660
        %1744 = vmatmul.bf16.gmra.mxu0 %v1450
        %v1745 = vpop.f32.mrf.mxu0
        %v1746 = vadd.f32 %v1732, %v1745
        %v1747 = vpop.f32.mrf.mxu0
        %v1748 = vadd.f32 %v1734, %v1747
        %1749 = vdwg.mxu0
        %1750 = vmatpush.bf16.msra.mxu0 %v1675
        %1751 = vmatpush.bf16.msra.mxu0 %v1674
        %1752 = vmatpush.bf16.msra.mxu0 %v1673
        %1753 = vmatpush.bf16.msra.mxu0 %v1672
        %1754 = vmatpush.bf16.msra.mxu0 %v1671
        %1755 = vmatpush.bf16.msra.mxu0 %v1670
        %1756 = vmatpush.bf16.msra.mxu0 %v1669
        %1757 = vmatpush.bf16.msra.mxu0 %v1668
        %1758 = vmatmul.bf16.gmra.mxu0 %v1451
        %v1759 = vpop.f32.mrf.mxu0
        %v1760 = vadd.f32 %v1746, %v1759
        %v1761 = vpop.f32.mrf.mxu0
        %v1762 = vadd.f32 %v1748, %v1761
        %1763 = vdwg.mxu0
        %v1764 = vadd.f32 %v1446, %v1760
        %v1765 = vadd.f32 %v1447, %v1762
        %1766 = vst [vmem:[#allocation2] sm:$0xff] %v1764
        %1767 = vst [vmem:[#allocation2 + $0x8] sm:$0xff] %v1765
        // Predicated region
        $region49: #{tpu_custom_call.1} parent=31 // pred_check
          %p1768 = pneg %p268
        $region50: #{tpu_custom_call.1} parent=31 // pred_check_branch
          %1770 = sbr.rel (%p1768) target = $region52
        $region51: #{tpu_custom_call.1} parent=31 // pred_region
          %v1771 = vld [vmem:[#allocation2] sm:$0xff]
          %v1772 = vld [vmem:[#allocation2 + $0x8] sm:$0xff]
          %v1773 = vpack.c.bf16 %v1771, %v1771
          %v1774 = vpack.c.bf16 %v1772, %v1772
          %1775 = vst [vmem:[%s263] sm:$0xf] %v1773
          %1776 = vst [vmem:[%s263 + $0x4] sm:$0xf] %v1774
        $region52: #{tpu_custom_call.1} parent=31 // pred_fallthru
          _
        %s1777 = sand.u32 %s128, 1
        %s1778 = scalar_lea.sflag [#allocation5], %s1777
        %s1779 = sand.u32 %s128, 1
        %s1780 = smul.addr %s1779, 8
        %s1781 = scalar_lea.vmem [#allocation9], %s1780
        // Predicated region
        $region53: #{tpu_custom_call.1} parent=31 // pred_check
          %p1782 = pneg %p138
        $region54: #{tpu_custom_call.1} parent=31 // pred_check_branch
          %1784 = sbr.rel (%p1782) target = $region56
        $region55: #{tpu_custom_call.1} parent=31 // pred_region
          %s1785 = smul.u32 2, %s24
          %1787 = vsyncadd %s1778, 0
          %s1788 = smul.addr %s1785, 2
          %s1789 = sadd.s32 %s25, %s1788
          %s1790 = smul.addr %s1789, 4
          %s1791 = scalar_lea.hbm %s3, %s1790
          %s1792 = sshll.u32 %s1781, 4
          %s1793 = int_to_ptr.vmem [resolvable:$true] %s1792
          %s1794 = sshll.u32 %s1791, 4
          %s1795 = int_to_ptr.hbm [resolvable:$true] %s1794
          %1800 = dma.vmem_to_hbm [thread:$0]  %s1793, 128, %s1795, %s1778, 64, 128, 4
        $region56: #{tpu_custom_call.1} parent=31 // pred_fallthru
          _
      $region32: #{tpu_custom_call.1} parent=5 // pred_fallthru
        _
      %p1801 = scmp.le.s32.totalorder 2, %s14
      // Predicated region
      $region57: #{tpu_custom_call.1} parent=5 // pred_check
        %p1802 = pneg %p1801
      $region58: #{tpu_custom_call.1} parent=5 // pred_check_branch
        %1804 = sbr.rel (%p1802) target = $region60
      $region59: #{tpu_custom_call.1} parent=5 // pred_region
        %s1805 = ssub.s32 %s14, 2
        // Predicated region
        $region61: #{tpu_custom_call.1} parent=59 // pred_check
          %p1806 = pneg %p144
        $region62: #{tpu_custom_call.1} parent=59 // pred_check_branch
          %1808 = sbr.rel (%p1806) target = $region64
        $region63: #{tpu_custom_call.1} parent=59 // pred_region
          %s1809 = sand.u32 %s129, 1
          %s1810 = scalar_lea.sflag [#allocation5], %s1809
          %s1811 = sand.u32 %s129, 1
          %s1812 = smul.addr %s1811, 8
          %s1813 = scalar_lea.vmem [#allocation9], %s1812
          %1815 = dma.done %s1810, 128
        $region64: #{tpu_custom_call.1} parent=59 // pred_fallthru
          _
      $region60: #{tpu_custom_call.1} parent=5 // pred_fallthru
        _
    $region6: #{tpu_custom_call.1} parent=1 // loop_footer
      %s18 = sadd.s32 1, %s14
    $region7: #{tpu_custom_call.1} parent=1 // loop_footer_branch
      %13 = sbr.rel target = $region3
    $region8: #{tpu_custom_call.1} parent=1 // loop_exit
      _
    %1816 = vsyncpa [#allocation4], 1
    %s1817 = scalar_lea.sflag [#allocation4], 1
    %1818 = vsyncpa %s1817, 1
    %1819 = vsyncpa [#allocation7], 1
    %1820 = vsyncpa [#allocation5], 1
    %s1821 = scalar_lea.sflag [#allocation5], 1
    %1822 = vsyncpa %s1821, 1

</llo_original>
